<compile_context>
chip_gen: v7x
topology: tpu7x:2x2x1
jax: 0.10.0
libtpu: 0.0.40
codegen_flags: <defaults>
</compile_context>

<pallas_src>
import math

import jax
import jax.numpy as jnp
from jax import lax
from jax.experimental import pallas as pl
from jax.experimental.pallas import tpu as pltpu

# ---- small, deterministic config (module hard-codes style_dim=512; shrunk for test) ----
B = 2            # batch
S = 128          # style_dim
C = 128          # channels at the 4x4 resolution
H = W = 4        # img_size = 4
HW = H * W
K = 3
RGB_PAD = 128                                # lane-dense ToRGB width (real channels = 3)
NEG_SLOPE = 0.2
ACT_GAIN = math.sqrt(2.0)                    # FusedLeakyReLU scale
MOD_SCALE = 1.0 / math.sqrt(S)               # EqualLinear scale (lr_mul=1)
CONV1_SCALE = 1.0 / math.sqrt(C * K * K)     # ModulatedConv2d scale (3x3)
RGB_SCALE = 1.0 / math.sqrt(C * 1 * 1)       # ModulatedConv2d scale (1x1)


def _generator_kernel(latent_ref, patches_ref, w1_ref, w1sq_ref,
                      wmod1_ref, bmod1_ref, bias1_ref, noise_ref,
                      wmodr_ref, bmodr_ref, wrgb_ref, brgb_ref, o_ref):
    lat = latent_ref[...]                                              # [B, S]

    # conv1 style modulation (EqualLinear, bias_init=1)
    style1 = jnp.dot(lat, wmod1_ref[...], preferred_element_type=jnp.float32)
    style1 = style1 * MOD_SCALE + bmod1_ref[...]                       # [B, C]
    style_t = jnp.concatenate([style1] * (K * K), axis=1)              # [B, 9C] tap-major

    # modulated 3x3 conv: one stacked im2col matmul over the whole batch
    xmod = patches_ref[...] * style_t[:, None, :]                      # [B, HW, 9C]
    xmod = xmod.reshape(B * HW, K * K * C).astype(jnp.bfloat16)
    out = jnp.dot(xmod, w1_ref[...], preferred_element_type=jnp.float32)   # [B*HW, C]
    out = out.reshape(B, HW, C)

    # demodulation via precomputed per-(in,out) squared-weight reduction
    demod = lax.rsqrt(
        jnp.dot(style1 * style1, w1sq_ref[...],
                preferred_element_type=jnp.float32) + 1e-8)            # [B, C]
    out = out * demod[:, None, :]

    # noise injection (strength pre-folded in wrapper) + FusedLeakyReLU
    out = out + noise_ref[...]                                         # [B, HW, 1]
    out = out + bias1_ref[...]                                         # [1, C]
    out = jnp.where(out >= 0, out, NEG_SLOPE * out) * ACT_GAIN

    # to_rgb1: modulated 1x1 conv, NO demodulation, + bias (lane-padded to 128)
    styler = jnp.dot(lat, wmodr_ref[...], preferred_element_type=jnp.float32)
    styler = styler * MOD_SCALE + bmodr_ref[...]                       # [B, C]
    rgb_in = (out * styler[:, None, :]).reshape(B * HW, C)
    rgb = jnp.dot(rgb_in, wrgb_ref[...], preferred_element_type=jnp.float32)
    o_ref[...] = rgb + brgb_ref[...]                                   # [B*HW, 128]


def im2col_const(const):
    # const: [C, H, W] -> [HW, 9C], column index = tap*C + c, tap = ky*3 + kx (pad=1)
    xp = jnp.pad(const, ((0, 0), (1, 1), (1, 1)))
    cols = []
    for ky in range(K):
        for kx in range(K):
            cols.append(xp[:, ky:ky + H, kx:kx + W].reshape(C, HW).T)   # [HW, C]
    return jnp.concatenate(cols, axis=1)


def init_params(key):
    # Deterministic synthetic parameters (stand-in for the g_ema checkpoint).
    ks = jax.random.split(key, 8)
    p = {
        "const": jax.random.normal(ks[0], (C, H, W), jnp.float32),       # ConstantInput
        "W1":    jax.random.normal(ks[1], (C, C, K, K), jnp.float32),    # conv1 weight [O,I,k,k]
        "wmod1": jax.random.normal(ks[2], (S, C), jnp.float32),          # EqualLinear weight^T
        "bmod1": jnp.ones((1, C), jnp.float32),                          # bias_init = 1
        "bias1": 0.1 * jax.random.normal(ks[3], (1, C), jnp.float32),    # FusedLeakyReLU bias
        "noise_w": 0.1 * jax.random.normal(ks[4], (1, 1), jnp.float32),  # NoiseInjection weight
        "Wrgb":  jax.random.normal(ks[5], (3, C), jnp.float32),          # to_rgb weight [3, C]
        "wmodr": jax.random.normal(ks[6], (S, C), jnp.float32),
        "bmodr": jnp.ones((1, C), jnp.float32),
        "brgb":  0.1 * jax.random.normal(ks[7], (1, 3), jnp.float32),    # ToRGB bias
    }
    # ---- input-invariant preprocessing, hoisted out of the forward ----
    w1_scaled = CONV1_SCALE * p["W1"]                                    # [O, I, 3, 3]
    p["patches"] = im2col_const(p["const"])                              # [HW, 9C] f32
    p["w1"] = jnp.transpose(w1_scaled, (2, 3, 1, 0)).reshape(
        K * K * C, C).astype(jnp.bfloat16)                               # [9C, C] bf16
    p["w1sq_red"] = jnp.sum(w1_scaled * w1_scaled, axis=(2, 3)).T        # [C_in, C_out] f32
    p["wrgb_pad"] = jnp.pad(RGB_SCALE * p["Wrgb"].T,
                            ((0, 0), (0, RGB_PAD - 3)))                  # [C, 128]
    p["brgb_pad"] = jnp.pad(p["brgb"], ((0, 0), (0, RGB_PAD - 3)))       # [1, 128]
    return p


def zssgan2_forward(latents, params, noise_key):
    """latents: [B, S] W-space latents. Returns NCHW image [B, 3, H, W] and the noise used."""
    # randomize_noise=True -> fresh per-sample single-channel gaussian noise
    noise = jax.random.normal(noise_key, (B, HW, 1), jnp.float32)
    noise_scaled = noise * params["noise_w"][0, 0]        # fold NoiseInjection strength

    out = pl.pallas_call(
        _generator_kernel,
        out_shape=jax.ShapeDtypeStruct((B * HW, RGB_PAD), jnp.float32),
        grid_spec=pltpu.PrefetchScalarGridSpec(
            num_scalar_prefetch=0,
            grid=(1,),                                    # whole batch in one invocation
            in_specs=[
                pl.BlockSpec((B, S), lambda i: (0, 0)),               # latents
                pl.BlockSpec((HW, K * K * C), lambda i: (0, 0)),      # im2col of const input
                pl.BlockSpec((K * K * C, C), lambda i: (0, 0)),       # conv1 weight bf16 (scaled)
                pl.BlockSpec((C, C), lambda i: (0, 0)),               # demod squared-weight sum
                pl.BlockSpec((S, C), lambda i: (0, 0)),               # conv1 modulation weight
                pl.BlockSpec((1, C), lambda i: (0, 0)),               # conv1 modulation bias
                pl.BlockSpec((1, C), lambda i: (0, 0)),               # fused leaky-relu bias
                pl.BlockSpec((B, HW, 1), lambda i: (0, 0, 0)),        # pre-scaled noise
                pl.BlockSpec((S, C), lambda i: (0, 0)),               # to_rgb modulation weight
                pl.BlockSpec((1, C), lambda i: (0, 0)),               # to_rgb modulation bias
                pl.BlockSpec((C, RGB_PAD), lambda i: (0, 0)),         # to_rgb weight (lane-padded)
                pl.BlockSpec((1, RGB_PAD), lambda i: (0, 0)),         # to_rgb bias (lane-padded)
            ],
            out_specs=pl.BlockSpec((B * HW, RGB_PAD), lambda i: (0, 0)),
        ),
        compiler_params=pltpu.CompilerParams(dimension_semantics=("arbitrary",)),
    )(latents, params["patches"], params["w1"], params["w1sq_red"],
      params["wmod1"], params["bmod1"], params["bias1"], noise_scaled,
      params["wmodr"], params["bmodr"], params["wrgb_pad"], params["brgb_pad"])

    img = jnp.transpose(out[:, :3].reshape(B, H, W, 3), (0, 3, 1, 2))   # -> NCHW
    return img, noise


def reference_forward(latents, params, noise):
    """Pure-JAX NCHW reference mirroring the rosinality StyleGAN2 ops."""
    noise_nchw = noise[:, :, 0].reshape(B, 1, H, W)

    style1 = latents @ params["wmod1"] * MOD_SCALE + params["bmod1"]           # [B, C]
    w = CONV1_SCALE * params["W1"]                                             # [O, I, 3, 3]
    wmod = w[None] * style1[:, None, :, None, None]
    demod = lax.rsqrt(jnp.sum(wmod ** 2, axis=(2, 3, 4)) + 1e-8)
    wmod = wmod * demod[:, :, None, None, None]
    x = jnp.broadcast_to(params["const"][None], (B, C, H, W))

    conv = lambda xi, wi: lax.conv_general_dilated(
        xi[None], wi, (1, 1), "SAME", dimension_numbers=("NCHW", "OIHW", "NCHW"))[0]
    out = jax.vmap(conv)(x, wmod)
    out = out + noise_nchw * params["noise_w"][0, 0]
    out = out + params["bias1"][0][None, :, None, None]
    out = jnp.where(out >= 0, out, NEG_SLOPE * out) * ACT_GAIN

    styler = latents @ params["wmodr"] * MOD_SCALE + params["bmodr"]           # [B, C]
    wr = RGB_SCALE * params["Wrgb"][:, :, None, None]                          # [3, C, 1, 1]
    wrmod = wr[None] * styler[:, None, :, None, None]
    rgb = jax.vmap(conv)(out, wrmod) + params["brgb"][0][None, :, None, None]
    return rgb


if __name__ == "__main__":
    key = jax.random.PRNGKey(0)
    pkey, lkey, nkey = jax.random.split(key, 3)
    params = init_params(pkey)
    latents = jax.random.normal(lkey, (B, S), jnp.float32)

    img, noise = zssgan2_forward(latents, params, nkey)
    img = jax.block_until_ready(img)

    ref = reference_forward(latents, params, noise)
    assert img.shape == (B, 3, H, W)
    assert bool(jnp.isfinite(img).all())
    assert bool(jnp.allclose(img, ref, rtol=5e-2, atol=5e-2)), float(jnp.max(jnp.abs(img - ref)))
    print("KERNEL_OK")
</pallas_src>

<mosaic_0001>
module attributes {stable_mosaic.version = 11 : i64} {
  func.func @_generator_kernel(%arg0: i32, %arg1: memref<2x128xf32, #tpu.memory_space<vmem>>, %arg2: memref<16x1152xf32, #tpu.memory_space<vmem>>, %arg3: memref<1152x128xbf16, #tpu.memory_space<vmem>>, %arg4: memref<128x128xf32, #tpu.memory_space<vmem>>, %arg5: memref<128x128xf32, #tpu.memory_space<vmem>>, %arg6: memref<1x128xf32, #tpu.memory_space<vmem>>, %arg7: memref<1x128xf32, #tpu.memory_space<vmem>>, %arg8: memref<2x16x1xf32, #tpu.memory_space<vmem>>, %arg9: memref<128x128xf32, #tpu.memory_space<vmem>>, %arg10: memref<1x128xf32, #tpu.memory_space<vmem>>, %arg11: memref<128x128xf32, #tpu.memory_space<vmem>>, %arg12: memref<1x128xf32, #tpu.memory_space<vmem>>, %arg13: memref<32x128xf32, #tpu.memory_space<vmem>>) attributes {dimension_semantics = [#tpu.dimension_semantics<arbitrary>], iteration_bounds = array<i64: 1>, scalar_prefetch = 0 : i64, scratch_operands = 0 : i64, tpu.core_type = #tpu.core_type<tc>, window_params = [{pipeline_mode = #tpu.pipeline_mode<synchronous>, transform_indices = @transform_0, window_bounds = array<i64: 2, 128>}, {pipeline_mode = #tpu.pipeline_mode<synchronous>, transform_indices = @transform_1, window_bounds = array<i64: 16, 1152>}, {pipeline_mode = #tpu.pipeline_mode<synchronous>, transform_indices = @transform_2, window_bounds = array<i64: 1152, 128>}, {pipeline_mode = #tpu.pipeline_mode<synchronous>, transform_indices = @transform_3, window_bounds = array<i64: 128, 128>}, {pipeline_mode = #tpu.pipeline_mode<synchronous>, transform_indices = @transform_4, window_bounds = array<i64: 128, 128>}, {pipeline_mode = #tpu.pipeline_mode<synchronous>, transform_indices = @transform_5, window_bounds = array<i64: 1, 128>}, {pipeline_mode = #tpu.pipeline_mode<synchronous>, transform_indices = @transform_6, window_bounds = array<i64: 1, 128>}, {pipeline_mode = #tpu.pipeline_mode<synchronous>, transform_indices = @transform_7, window_bounds = array<i64: 2, 16, 1>}, {pipeline_mode = #tpu.pipeline_mode<synchronous>, transform_indices = @transform_8, window_bounds = array<i64: 128, 128>}, {pipeline_mode = #tpu.pipeline_mode<synchronous>, transform_indices = @transform_9, window_bounds = array<i64: 1, 128>}, {pipeline_mode = #tpu.pipeline_mode<synchronous>, transform_indices = @transform_10, window_bounds = array<i64: 128, 128>}, {pipeline_mode = #tpu.pipeline_mode<synchronous>, transform_indices = @transform_11, window_bounds = array<i64: 1, 128>}, {pipeline_mode = #tpu.pipeline_mode<synchronous>, transform_indices = @transform_12, window_bounds = array<i64: 32, 128>}]} {
    %c0 = arith.constant 0 : index
    %c0_0 = arith.constant 0 : index
    %0 = vector.load %arg1[%c0, %c0_0] : memref<2x128xf32, #tpu.memory_space<vmem>>, vector<2x128xf32>
    %c0_1 = arith.constant 0 : index
    %c0_2 = arith.constant 0 : index
    %1 = vector.load %arg5[%c0_1, %c0_2] : memref<128x128xf32, #tpu.memory_space<vmem>>, vector<128x128xf32>
    %cst = arith.constant dense<0.000000e+00> : vector<2x128xf32>
    %2 = tpu.matmul %0, %1, %cst {dimension_numbers = #tpu.dot_dimension_numbers<[1], [0], [0], [1], [0, 0, 1, 1], [], []>} : vector<2x128xf32>, vector<128x128xf32>, vector<2x128xf32> -> vector<2x128xf32>
    %cst_3 = arith.constant 0.0883883461 : f32
    %3 = vector.broadcast %cst_3 : f32 to vector<2x128xf32>
    %4 = arith.mulf %2, %3 : vector<2x128xf32>
    %c0_4 = arith.constant 0 : index
    %c0_5 = arith.constant 0 : index
    %5 = vector.load %arg6[%c0_4, %c0_5] : memref<1x128xf32, #tpu.memory_space<vmem>>, vector<1x128xf32>
    %6 = vector.broadcast %5 : vector<1x128xf32> to vector<2x128xf32>
    %7 = arith.addf %4, %6 : vector<2x128xf32>
    %8 = tpu.concatenate %7, %7, %7, %7, %7, %7, %7, %7, %7 in 1 : vector<2x128xf32>, vector<2x128xf32>, vector<2x128xf32>, vector<2x128xf32>, vector<2x128xf32>, vector<2x128xf32>, vector<2x128xf32>, vector<2x128xf32>, vector<2x128xf32> -> vector<2x1152xf32>
    %c0_6 = arith.constant 0 : index
    %c0_7 = arith.constant 0 : index
    %9 = vector.load %arg2[%c0_6, %c0_7] : memref<16x1152xf32, #tpu.memory_space<vmem>>, vector<16x1152xf32>
    %10 = vector.shape_cast %8 : vector<2x1152xf32> to vector<2x1x1152xf32>
    %11 = vector.shape_cast %9 : vector<16x1152xf32> to vector<1x16x1152xf32>
    %12 = vector.broadcast %11 : vector<1x16x1152xf32> to vector<2x16x1152xf32>
    %13 = vector.broadcast %10 : vector<2x1x1152xf32> to vector<2x16x1152xf32>
    %14 = arith.mulf %12, %13 : vector<2x16x1152xf32>
    %15 = vector.shape_cast %14 : vector<2x16x1152xf32> to vector<32x1152xf32>
    %16 = arith.truncf %15 : vector<32x1152xf32> to vector<32x1152xbf16>
    %c0_8 = arith.constant 0 : index
    %c0_9 = arith.constant 0 : index
    %17 = vector.load %arg3[%c0_8, %c0_9] : memref<1152x128xbf16, #tpu.memory_space<vmem>>, vector<1152x128xbf16>
    %cst_10 = arith.constant dense<0.000000e+00> : vector<32x128xf32>
    %18 = tpu.matmul %16, %17, %cst_10 {dimension_numbers = #tpu.dot_dimension_numbers<[1], [0], [0], [1], [0, 0, 1, 1], [], []>} : vector<32x1152xbf16>, vector<1152x128xbf16>, vector<32x128xf32> -> vector<32x128xf32>
    %19 = vector.shape_cast %18 : vector<32x128xf32> to vector<2x16x128xf32>
    %20 = arith.mulf %7, %7 : vector<2x128xf32>
    %c0_11 = arith.constant 0 : index
    %c0_12 = arith.constant 0 : index
    %21 = vector.load %arg4[%c0_11, %c0_12] : memref<128x128xf32, #tpu.memory_space<vmem>>, vector<128x128xf32>
    %cst_13 = arith.constant dense<0.000000e+00> : vector<2x128xf32>
    %22 = tpu.matmul %20, %21, %cst_13 {dimension_numbers = #tpu.dot_dimension_numbers<[1], [0], [0], [1], [0, 0, 1, 1], [], []>} : vector<2x128xf32>, vector<128x128xf32>, vector<2x128xf32> -> vector<2x128xf32>
    %cst_14 = arith.constant 9.99999993E-9 : f32
    %23 = vector.broadcast %cst_14 : f32 to vector<2x128xf32>
    %24 = arith.addf %22, %23 : vector<2x128xf32>
    %25 = math.rsqrt %24 : vector<2x128xf32>
    %26 = vector.shape_cast %25 : vector<2x128xf32> to vector<2x1x128xf32>
    %27 = vector.broadcast %26 : vector<2x1x128xf32> to vector<2x16x128xf32>
    %28 = arith.mulf %19, %27 : vector<2x16x128xf32>
    %c0_15 = arith.constant 0 : index
    %c0_16 = arith.constant 0 : index
    %c0_17 = arith.constant 0 : index
    %29 = vector.load %arg8[%c0_15, %c0_16, %c0_17] : memref<2x16x1xf32, #tpu.memory_space<vmem>>, vector<2x16x1xf32>
    %30 = vector.broadcast %29 : vector<2x16x1xf32> to vector<2x16x128xf32>
    %31 = arith.addf %28, %30 : vector<2x16x128xf32>
    %c0_18 = arith.constant 0 : index
    %c0_19 = arith.constant 0 : index
    %32 = vector.load %arg7[%c0_18, %c0_19] : memref<1x128xf32, #tpu.memory_space<vmem>>, vector<1x128xf32>
    %33 = vector.shape_cast %32 : vector<1x128xf32> to vector<1x1x128xf32>
    %34 = vector.broadcast %33 : vector<1x1x128xf32> to vector<2x16x128xf32>
    %35 = arith.addf %31, %34 : vector<2x16x128xf32>
    %cst_20 = arith.constant 0.000000e+00 : f32
    %36 = vector.broadcast %cst_20 : f32 to vector<2x16x128xf32>
    %37 = arith.cmpf oge, %35, %36 : vector<2x16x128xf32>
    %cst_21 = arith.constant 2.000000e-01 : f32
    %38 = vector.broadcast %cst_21 : f32 to vector<2x16x128xf32>
    %39 = arith.mulf %38, %35 : vector<2x16x128xf32>
    %40 = arith.select %37, %35, %39 : vector<2x16x128xi1>, vector<2x16x128xf32>
    %cst_22 = arith.constant 1.41421354 : f32
    %41 = vector.broadcast %cst_22 : f32 to vector<2x16x128xf32>
    %42 = arith.mulf %40, %41 : vector<2x16x128xf32>
    %c0_23 = arith.constant 0 : index
    %c0_24 = arith.constant 0 : index
    %43 = vector.load %arg9[%c0_23, %c0_24] : memref<128x128xf32, #tpu.memory_space<vmem>>, vector<128x128xf32>
    %cst_25 = arith.constant dense<0.000000e+00> : vector<2x128xf32>
    %44 = tpu.matmul %0, %43, %cst_25 {dimension_numbers = #tpu.dot_dimension_numbers<[1], [0], [0], [1], [0, 0, 1, 1], [], []>} : vector<2x128xf32>, vector<128x128xf32>, vector<2x128xf32> -> vector<2x128xf32>
    %cst_26 = arith.constant 0.0883883461 : f32
    %45 = vector.broadcast %cst_26 : f32 to vector<2x128xf32>
    %46 = arith.mulf %44, %45 : vector<2x128xf32>
    %c0_27 = arith.constant 0 : index
    %c0_28 = arith.constant 0 : index
    %47 = vector.load %arg10[%c0_27, %c0_28] : memref<1x128xf32, #tpu.memory_space<vmem>>, vector<1x128xf32>
    %48 = vector.broadcast %47 : vector<1x128xf32> to vector<2x128xf32>
    %49 = arith.addf %46, %48 : vector<2x128xf32>
    %50 = vector.shape_cast %49 : vector<2x128xf32> to vector<2x1x128xf32>
    %51 = vector.broadcast %50 : vector<2x1x128xf32> to vector<2x16x128xf32>
    %52 = arith.mulf %42, %51 : vector<2x16x128xf32>
    %53 = vector.shape_cast %52 : vector<2x16x128xf32> to vector<32x128xf32>
    %c0_29 = arith.constant 0 : index
    %c0_30 = arith.constant 0 : index
    %54 = vector.load %arg11[%c0_29, %c0_30] : memref<128x128xf32, #tpu.memory_space<vmem>>, vector<128x128xf32>
    %cst_31 = arith.constant dense<0.000000e+00> : vector<32x128xf32>
    %55 = tpu.matmul %53, %54, %cst_31 {dimension_numbers = #tpu.dot_dimension_numbers<[1], [0], [0], [1], [0, 0, 1, 1], [], []>} : vector<32x128xf32>, vector<128x128xf32>, vector<32x128xf32> -> vector<32x128xf32>
    %c0_32 = arith.constant 0 : index
    %c0_33 = arith.constant 0 : index
    %56 = vector.load %arg12[%c0_32, %c0_33] : memref<1x128xf32, #tpu.memory_space<vmem>>, vector<1x128xf32>
    %57 = vector.broadcast %56 : vector<1x128xf32> to vector<32x128xf32>
    %58 = arith.addf %55, %57 : vector<32x128xf32>
    %c0_34 = arith.constant 0 : index
    %c0_35 = arith.constant 0 : index
    %59 = vector.load %arg13[%c0_34, %c0_35] : memref<32x128xf32, #tpu.memory_space<vmem>>, vector<32x128xf32>
    tpu.vector_store %arg13[%c0_34, %c0_35], %58 {strides = array<i32>} : memref<32x128xf32, #tpu.memory_space<vmem>>, vector<32x128xf32>,
    return
  }
  func.func @transform_0(%arg0: i32) -> (i32, i32) {
    %c0_i32 = arith.constant 0 : i32
    %c0_i32_0 = arith.constant 0 : i32
    %c0_i32_1 = arith.constant 0 : i32
    return %c0_i32, %c0_i32_0 : i32, i32
  }
  func.func @transform_1(%arg0: i32) -> (i32, i32) {
    %c0_i32 = arith.constant 0 : i32
    %c0_i32_0 = arith.constant 0 : i32
    %c0_i32_1 = arith.constant 0 : i32
    return %c0_i32, %c0_i32_0 : i32, i32
  }
  func.func @transform_2(%arg0: i32) -> (i32, i32) {
    %c0_i32 = arith.constant 0 : i32
    %c0_i32_0 = arith.constant 0 : i32
    %c0_i32_1 = arith.constant 0 : i32
    return %c0_i32, %c0_i32_0 : i32, i32
  }
  func.func @transform_3(%arg0: i32) -> (i32, i32) {
    %c0_i32 = arith.constant 0 : i32
    %c0_i32_0 = arith.constant 0 : i32
    %c0_i32_1 = arith.constant 0 : i32
    return %c0_i32, %c0_i32_0 : i32, i32
  }
  func.func @transform_4(%arg0: i32) -> (i32, i32) {
    %c0_i32 = arith.constant 0 : i32
    %c0_i32_0 = arith.constant 0 : i32
    %c0_i32_1 = arith.constant 0 : i32
    return %c0_i32, %c0_i32_0 : i32, i32
  }
  func.func @transform_5(%arg0: i32) -> (i32, i32) {
    %c0_i32 = arith.constant 0 : i32
    %c0_i32_0 = arith.constant 0 : i32
    %c0_i32_1 = arith.constant 0 : i32
    return %c0_i32, %c0_i32_0 : i32, i32
  }
  func.func @transform_6(%arg0: i32) -> (i32, i32) {
    %c0_i32 = arith.constant 0 : i32
    %c0_i32_0 = arith.constant 0 : i32
    %c0_i32_1 = arith.constant 0 : i32
    return %c0_i32, %c0_i32_0 : i32, i32
  }
  func.func @transform_7(%arg0: i32) -> (i32, i32, i32) {
    %c0_i32 = arith.constant 0 : i32
    %c0_i32_0 = arith.constant 0 : i32
    %c0_i32_1 = arith.constant 0 : i32
    %c0_i32_2 = arith.constant 0 : i32
    return %c0_i32, %c0_i32_0, %c0_i32_1 : i32, i32, i32
  }
  func.func @transform_8(%arg0: i32) -> (i32, i32) {
    %c0_i32 = arith.constant 0 : i32
    %c0_i32_0 = arith.constant 0 : i32
    %c0_i32_1 = arith.constant 0 : i32
    return %c0_i32, %c0_i32_0 : i32, i32
  }
  func.func @transform_9(%arg0: i32) -> (i32, i32) {
    %c0_i32 = arith.constant 0 : i32
    %c0_i32_0 = arith.constant 0 : i32
    %c0_i32_1 = arith.constant 0 : i32
    return %c0_i32, %c0_i32_0 : i32, i32
  }
  func.func @transform_10(%arg0: i32) -> (i32, i32) {
    %c0_i32 = arith.constant 0 : i32
    %c0_i32_0 = arith.constant 0 : i32
    %c0_i32_1 = arith.constant 0 : i32
    return %c0_i32, %c0_i32_0 : i32, i32
  }
  func.func @transform_11(%arg0: i32) -> (i32, i32) {
    %c0_i32 = arith.constant 0 : i32
    %c0_i32_0 = arith.constant 0 : i32
    %c0_i32_1 = arith.constant 0 : i32
    return %c0_i32, %c0_i32_0 : i32, i32
  }
  func.func @transform_12(%arg0: i32) -> (i32, i32) {
    %c0_i32 = arith.constant 0 : i32
    %c0_i32_0 = arith.constant 0 : i32
    %c0_i32_1 = arith.constant 0 : i32
    return %c0_i32, %c0_i32_0 : i32, i32
  }
}

</mosaic_0001>

<llo_original>
// kernel: tpu_custom_call.1
$region0: #{tpu_custom_call.1}
  #allocation0 [shape = 'u32[]', space=smem, size = 0x4, offset = 0x4, fixed_abs, tag = 'smem constant byte address 0x4 - core index']
  #allocation1 [shape = 'u32[144,128]{1,0:T(1,128)}', space=vmem, size = 0x12000, scoped, tag = 'internal scratch']
  %s0 = inlined_call_operand.vmem [shape: f32[2,128], index: 0, kind: input, shape index: {}]
  %s1 = inlined_call_operand.hbm [shape: f32[16,1152], index: 1, kind: input, shape index: {}]
  %s2 = inlined_call_operand.hbm [shape: bf16[1152,128], index: 2, kind: input, shape index: {}]
  %s3 = inlined_call_operand.hbm [shape: f32[128,128], index: 3, kind: input, shape index: {}]
  %s4 = inlined_call_operand.hbm [shape: f32[128,128], index: 4, kind: input, shape index: {}]
  %s5 = inlined_call_operand.vmem [shape: f32[1,128], index: 5, kind: input, shape index: {}]
  %s6 = inlined_call_operand.vmem [shape: f32[1,128], index: 6, kind: input, shape index: {}]
  %s7 = inlined_call_operand.vmem [shape: f32[2,16,1], index: 7, kind: input, shape index: {}]
  %s8 = inlined_call_operand.hbm [shape: f32[128,128], index: 8, kind: input, shape index: {}]
  %s9 = inlined_call_operand.vmem [shape: f32[1,128], index: 9, kind: input, shape index: {}]
  %s10 = inlined_call_operand.hbm [shape: f32[128,128], index: 10, kind: input, shape index: {}]
  %s11 = inlined_call_operand.vmem [shape: f32[1,128], index: 11, kind: input, shape index: {}]
  %s12 = inlined_call_operand.hbm [shape: f32[32,128], index: 12, kind: output, shape index: {}]
  %s13 = sld [smem:[#allocation0]]
  $region82: #{tpu_custom_call.1} parent=0
    _
  %s15 = ssub.s32 1, %s13
  %s16 = scalar_select 0, %s15, %s13
  $region1: #{tpu_custom_call.1} parent=0
    #allocation2 [shape = 'u8[73728]{0}', space=vmem, size = 0x12000, scoped, tag = 'input window, operand 1, single buffered']
    #allocation3 [shape = 's32[1]{0}', space=sflag, size = 0x4, scoped, tag = 'scoped memory for tpu_custom_call.1']
    #allocation4 [shape = 's32[1]{0}', space=sflag, size = 0x4, scoped, tag = 'scoped memory for tpu_custom_call.1']
    #allocation5 [shape = 'u8[294912]{0}', space=vmem, size = 0x48000, scoped, tag = 'input window, operand 2, single buffered']
    #allocation6 [shape = 's32[1]{0}', space=sflag, size = 0x4, scoped, tag = 'scoped memory for tpu_custom_call.1']
    #allocation7 [shape = 'u8[65536]{0}', space=vmem, size = 0x10000, scoped, tag = 'input window, operand 3, single buffered']
    #allocation8 [shape = 'u8[65536]{0}', space=vmem, size = 0x10000, scoped, tag = 'input window, operand 4, single buffered']
    #allocation9 [shape = 's32[1]{0}', space=sflag, size = 0x4, scoped, tag = 'scoped memory for tpu_custom_call.1']
    #allocation10 [shape = 'u8[65536]{0}', space=vmem, size = 0x10000, scoped, tag = 'input window, operand 8, single buffered']
    #allocation11 [shape = 'u8[65536]{0}', space=vmem, size = 0x10000, scoped, tag = 'input window, operand 10, single buffered']
    #allocation12 [shape = 's32[1]{0}', space=sflag, size = 0x4, scoped, tag = 'scoped memory for tpu_custom_call.1']
    #allocation13 [shape = 'u8[16384]{0}', space=vmem, size = 0x4000, scoped, tag = 'output window, operand 0, single buffered']
    %17 = vsyncpa [#allocation3], 0
    %18 = vsyncpa [#allocation6], 0
    %19 = vsyncpa [#allocation9], 0
    %20 = vsyncpa [#allocation12], 0
    %21 = vsyncpa [#allocation4], 0
    // Predicated region
    $region2: #{tpu_custom_call.1} parent=1 // pred_check
      _
    $region3: #{tpu_custom_call.1} parent=1 // pred_check_branch
      %23 = sbr.rel (0) target = $region5
    $region4: #{tpu_custom_call.1} parent=1 // pred_region
      _
    $region5: #{tpu_custom_call.1} parent=1 // pred_fallthru
      _
    // Predicated region
    $region6: #{tpu_custom_call.1} parent=1 // pred_check
      _
    $region7: #{tpu_custom_call.1} parent=1 // pred_check_branch
      %25 = sbr.rel (0) target = $region9
    $region8: #{tpu_custom_call.1} parent=1 // pred_region
      %s27 = ssub.s32 2304, 2304
      %28 = vsyncadd [#allocation3], %s27
      %s29 = sshll.u32 [#allocation2], 4
      %s30 = int_to_ptr.vmem [resolvable:$true] %s29
      %35 = dma.hbm_to_vmem [thread:$0]  %s1, 2304, %s30, [#allocation3], 1152, 1152, 72
    $region9: #{tpu_custom_call.1} parent=1 // pred_fallthru
      _
    // Predicated region
    $region10: #{tpu_custom_call.1} parent=1 // pred_check
      _
    $region11: #{tpu_custom_call.1} parent=1 // pred_check_branch
      %37 = sbr.rel (0) target = $region13
    $region12: #{tpu_custom_call.1} parent=1 // pred_region
      %s39 = ssub.s32 9216, 9216
      %40 = vsyncadd [#allocation6], %s39
      %s41 = sshll.u32 [#allocation5], 4
      %s42 = int_to_ptr.vmem [resolvable:$true] %s41
      %47 = dma.hbm_to_vmem [thread:$0]  %s2, 9216, %s42, [#allocation6], 64, 64, 4
    $region13: #{tpu_custom_call.1} parent=1 // pred_fallthru
      _
    // Predicated region
    $region14: #{tpu_custom_call.1} parent=1 // pred_check
      _
    $region15: #{tpu_custom_call.1} parent=1 // pred_check_branch
      %49 = sbr.rel (0) target = $region17
    $region16: #{tpu_custom_call.1} parent=1 // pred_region
      %s51 = ssub.s32 2048, 2048
      %52 = vsyncadd [#allocation6], %s51
      %s53 = sshll.u32 [#allocation7], 4
      %s54 = int_to_ptr.vmem [resolvable:$true] %s53
      %59 = dma.hbm_to_vmem [thread:$0]  %s3, 2048, %s54, [#allocation6], 128, 128, 8
    $region17: #{tpu_custom_call.1} parent=1 // pred_fallthru
      _
    // Predicated region
    $region18: #{tpu_custom_call.1} parent=1 // pred_check
      _
    $region19: #{tpu_custom_call.1} parent=1 // pred_check_branch
      %61 = sbr.rel (0) target = $region21
    $region20: #{tpu_custom_call.1} parent=1 // pred_region
      %s63 = ssub.s32 2048, 2048
      %64 = vsyncadd [#allocation9], %s63
      %s65 = sshll.u32 [#allocation8], 4
      %s66 = int_to_ptr.vmem [resolvable:$true] %s65
      %71 = dma.hbm_to_vmem [thread:$0]  %s4, 2048, %s66, [#allocation9], 128, 128, 8
    $region21: #{tpu_custom_call.1} parent=1 // pred_fallthru
      _
    // Predicated region
    $region22: #{tpu_custom_call.1} parent=1 // pred_check
      _
    $region23: #{tpu_custom_call.1} parent=1 // pred_check_branch
      %73 = sbr.rel (0) target = $region25
    $region24: #{tpu_custom_call.1} parent=1 // pred_region
      _
    $region25: #{tpu_custom_call.1} parent=1 // pred_fallthru
      _
    // Predicated region
    $region26: #{tpu_custom_call.1} parent=1 // pred_check
      _
    $region27: #{tpu_custom_call.1} parent=1 // pred_check_branch
      %75 = sbr.rel (0) target = $region29
    $region28: #{tpu_custom_call.1} parent=1 // pred_region
      _
    $region29: #{tpu_custom_call.1} parent=1 // pred_fallthru
      _
    // Predicated region
    $region30: #{tpu_custom_call.1} parent=1 // pred_check
      _
    $region31: #{tpu_custom_call.1} parent=1 // pred_check_branch
      %77 = sbr.rel (0) target = $region33
    $region32: #{tpu_custom_call.1} parent=1 // pred_region
      _
    $region33: #{tpu_custom_call.1} parent=1 // pred_fallthru
      _
    // Predicated region
    $region34: #{tpu_custom_call.1} parent=1 // pred_check
      _
    $region35: #{tpu_custom_call.1} parent=1 // pred_check_branch
      %79 = sbr.rel (0) target = $region37
    $region36: #{tpu_custom_call.1} parent=1 // pred_region
      %s81 = ssub.s32 2048, 2048
      %82 = vsyncadd [#allocation9], %s81
      %s83 = sshll.u32 [#allocation10], 4
      %s84 = int_to_ptr.vmem [resolvable:$true] %s83
      %89 = dma.hbm_to_vmem [thread:$0]  %s8, 2048, %s84, [#allocation9], 128, 128, 8
    $region37: #{tpu_custom_call.1} parent=1 // pred_fallthru
      _
    // Predicated region
    $region38: #{tpu_custom_call.1} parent=1 // pred_check
      _
    $region39: #{tpu_custom_call.1} parent=1 // pred_check_branch
      %91 = sbr.rel (0) target = $region41
    $region40: #{tpu_custom_call.1} parent=1 // pred_region
      _
    $region41: #{tpu_custom_call.1} parent=1 // pred_fallthru
      _
    // Predicated region
    $region42: #{tpu_custom_call.1} parent=1 // pred_check
      _
    $region43: #{tpu_custom_call.1} parent=1 // pred_check_branch
      %93 = sbr.rel (0) target = $region45
    $region44: #{tpu_custom_call.1} parent=1 // pred_region
      %s95 = ssub.s32 2048, 2048
      %96 = vsyncadd [#allocation12], %s95
      %s97 = sshll.u32 [#allocation11], 4
      %s98 = int_to_ptr.vmem [resolvable:$true] %s97
      %103 = dma.hbm_to_vmem [thread:$0]  %s10, 2048, %s98, [#allocation12], 128, 128, 8
    $region45: #{tpu_custom_call.1} parent=1 // pred_fallthru
      _
    // Predicated region
    $region46: #{tpu_custom_call.1} parent=1 // pred_check
      _
    $region47: #{tpu_custom_call.1} parent=1 // pred_check_branch
      %105 = sbr.rel (0) target = $region49
    $region48: #{tpu_custom_call.1} parent=1 // pred_region
      _
    $region49: #{tpu_custom_call.1} parent=1 // pred_fallthru
      _
    // Predicated region
    $region50: #{tpu_custom_call.1} parent=1 // pred_check
      _
    $region51: #{tpu_custom_call.1} parent=1 // pred_check_branch
      %107 = sbr.rel (0) target = $region53
    $region52: #{tpu_custom_call.1} parent=1 // pred_region
      %108 = dma.done [#allocation3], 2304
    $region53: #{tpu_custom_call.1} parent=1 // pred_fallthru
      _
    // Predicated region
    $region54: #{tpu_custom_call.1} parent=1 // pred_check
      _
    $region55: #{tpu_custom_call.1} parent=1 // pred_check_branch
      %110 = sbr.rel (0) target = $region57
    $region56: #{tpu_custom_call.1} parent=1 // pred_region
      %111 = dma.done [#allocation6], 9216
    $region57: #{tpu_custom_call.1} parent=1 // pred_fallthru
      _
    // Predicated region
    $region58: #{tpu_custom_call.1} parent=1 // pred_check
      _
    $region59: #{tpu_custom_call.1} parent=1 // pred_check_branch
      %113 = sbr.rel (0) target = $region61
    $region60: #{tpu_custom_call.1} parent=1 // pred_region
      %114 = dma.done [#allocation6], 2048
    $region61: #{tpu_custom_call.1} parent=1 // pred_fallthru
      _
    // Predicated region
    $region62: #{tpu_custom_call.1} parent=1 // pred_check
      _
    $region63: #{tpu_custom_call.1} parent=1 // pred_check_branch
      %116 = sbr.rel (0) target = $region65
    $region64: #{tpu_custom_call.1} parent=1 // pred_region
      %117 = dma.done [#allocation9], 2048
    $region65: #{tpu_custom_call.1} parent=1 // pred_fallthru
      _
    // Predicated region
    $region66: #{tpu_custom_call.1} parent=1 // pred_check
      _
    $region67: #{tpu_custom_call.1} parent=1 // pred_check_branch
      %119 = sbr.rel (0) target = $region69
    $region68: #{tpu_custom_call.1} parent=1 // pred_region
      %120 = dma.done [#allocation9], 2048
    $region69: #{tpu_custom_call.1} parent=1 // pred_fallthru
      _
    // Predicated region
    $region70: #{tpu_custom_call.1} parent=1 // pred_check
      _
    $region71: #{tpu_custom_call.1} parent=1 // pred_check_branch
      %122 = sbr.rel (0) target = $region73
    $region72: #{tpu_custom_call.1} parent=1 // pred_region
      %123 = dma.done [#allocation12], 2048
    $region73: #{tpu_custom_call.1} parent=1 // pred_fallthru
      _
    %v125 = vld [vmem:[%s0] sm:$0x3]
    %v126 = vld [vmem:[#allocation8] sm:$0xff]
    %v127 = vld [vmem:[#allocation8 + $0x8] sm:$0xff]
    %v128 = vld [vmem:[#allocation8 + $0x10] sm:$0xff]
    %v129 = vld [vmem:[#allocation8 + $0x18] sm:$0xff]
    %v130 = vld [vmem:[#allocation8 + $0x20] sm:$0xff]
    %v131 = vld [vmem:[#allocation8 + $0x28] sm:$0xff]
    %v132 = vld [vmem:[#allocation8 + $0x30] sm:$0xff]
    %v133 = vld [vmem:[#allocation8 + $0x38] sm:$0xff]
    %v134 = vld [vmem:[#allocation8 + $0x40] sm:$0xff]
    %v135 = vld [vmem:[#allocation8 + $0x48] sm:$0xff]
    %v136 = vld [vmem:[#allocation8 + $0x50] sm:$0xff]
    %v137 = vld [vmem:[#allocation8 + $0x58] sm:$0xff]
    %v138 = vld [vmem:[#allocation8 + $0x60] sm:$0xff]
    %v139 = vld [vmem:[#allocation8 + $0x68] sm:$0xff]
    %v140 = vld [vmem:[#allocation8 + $0x70] sm:$0xff]
    %v141 = vld [vmem:[#allocation8 + $0x78] sm:$0xff]
    %142 = vmatprep.subr.mxu0 0.0
    %143 = vmatpush1.msra.mxu0 %v126
    %144 = vmatprep.subr.mxu0 0.0
    %145 = vmatpush1.msra.mxu0 %v127
    %146 = vmatprep.subr.mxu0 0.0
    %147 = vmatpush1.msra.mxu0 %v128
    %148 = vmatprep.subr.mxu0 0.0
    %149 = vmatpush1.msra.mxu0 %v129
    %150 = vmatprep.subr.mxu0 0.0
    %151 = vmatpush1.msra.mxu0 %v130
    %152 = vmatprep.subr.mxu0 0.0
    %153 = vmatpush1.msra.mxu0 %v131
    %154 = vmatprep.subr.mxu0 0.0
    %155 = vmatpush1.msra.mxu0 %v132
    %156 = vmatprep.subr.mxu0 0.0
    %157 = vmatpush1.msra.mxu0 %v133
    %158 = vmatprep.subr.mxu0 0.0
    %159 = vmatpush1.msra.mxu0 %v134
    %160 = vmatprep.subr.mxu0 0.0
    %161 = vmatpush1.msra.mxu0 %v135
    %162 = vmatprep.subr.mxu0 0.0
    %163 = vmatpush1.msra.mxu0 %v136
    %164 = vmatprep.subr.mxu0 0.0
    %165 = vmatpush1.msra.mxu0 %v137
    %166 = vmatprep.subr.mxu0 0.0
    %167 = vmatpush1.msra.mxu0 %v138
    %168 = vmatprep.subr.mxu0 0.0
    %169 = vmatpush1.msra.mxu0 %v139
    %170 = vmatprep.subr.mxu0 0.0
    %171 = vmatpush1.msra.mxu0 %v140
    %172 = vmatprep.subr.mxu0 0.0
    %173 = vmatpush1.msra.mxu0 %v141
    %174 = vmatprep.subr.mxu0 0.0
    %175 = vmatpush1.msra.mxu0 0.0
    %176 = vmatprep.subr.mxu0 0.0
    %177 = vmatpush1.msra.mxu0 0.0
    %178 = vmatprep.subr.mxu0 0.0
    %179 = vmatpush1.msra.mxu0 0.0
    %180 = vmatprep.subr.mxu0 0.0
    %181 = vmatpush1.msra.mxu0 0.0
    %182 = vmatprep.subr.mxu0 0.0
    %183 = vmatpush1.msra.mxu0 0.0
    %184 = vmatprep.subr.mxu0 0.0
    %185 = vmatpush1.msra.mxu0 0.0
    %186 = vmatprep.subr.mxu0 0.0
    %187 = vmatpush1.msra.mxu0 0.0
    %188 = vmatprep.subr.mxu0 0.0
    %189 = vmatpush1.msra.mxu0 0.0
    %190 = vmatprep.subr.mxu0 0.0
    %191 = vmatpush1.msra.mxu0 0.0
    %192 = vmatprep.subr.mxu0 0.0
    %193 = vmatpush1.msra.mxu0 0.0
    %194 = vmatprep.subr.mxu0 0.0
    %195 = vmatpush1.msra.mxu0 0.0
    %196 = vmatprep.subr.mxu0 0.0
    %197 = vmatpush1.msra.mxu0 0.0
    %198 = vmatprep.subr.mxu0 0.0
    %199 = vmatpush1.msra.mxu0 0.0
    %200 = vmatprep.subr.mxu0 0.0
    %201 = vmatpush1.msra.mxu0 0.0
    %202 = vmatprep.subr.mxu0 0.0
    %203 = vmatpush1.msra.mxu0 0.0
    %204 = vmatprep.subr.mxu0 0.0
    %205 = vmatpush1.msra.mxu0 0.0
    %206 = vmatprep.mubr.f32.mxu0 0.0
    %207 = vmatmul.mubr.f32.gmra.mrb[0].mxu0 %v125
    %v208 = vpop.f32.mrb[0].mxu0
    %v209 = vadd.f32 0.0, %v208
    %v210 = vpop.f32.mrb[0].mxu0
    %211 = vdwg.mxu0
    %v212 = vmul.f32 %v209, 0.088388346
    %v213 = vld [vmem:[%s5] sm:$0x1]
    %v215 = vlaneseq
    %v216 = vshrl.u32 %v215, 7
    %v217 = vsub.s32 0, %v216
    %v218 = vrot.slane %v213, %v217
    %v220 = vadd.f32 %v212, %v218
    %v221 = vld [vmem:[#allocation2] sm:$0xff]
    %v222 = vld [vmem:[#allocation2 + $0x8] sm:$0xff]
    %v223 = vld [vmem:[#allocation2 + $0x10] sm:$0xff]
    %v224 = vld [vmem:[#allocation2 + $0x18] sm:$0xff]
    %v225 = vld [vmem:[#allocation2 + $0x20] sm:$0xff]
    %v226 = vld [vmem:[#allocation2 + $0x28] sm:$0xff]
    %v227 = vld [vmem:[#allocation2 + $0x30] sm:$0xff]
    %v228 = vld [vmem:[#allocation2 + $0x38] sm:$0xff]
    %v229 = vld [vmem:[#allocation2 + $0x40] sm:$0xff]
    %v230 = vld [vmem:[#allocation2 + $0x48] sm:$0xff]
    %v231 = vld [vmem:[#allocation2 + $0x50] sm:$0xff]
    %v232 = vld [vmem:[#allocation2 + $0x58] sm:$0xff]
    %v233 = vld [vmem:[#allocation2 + $0x60] sm:$0xff]
    %v234 = vld [vmem:[#allocation2 + $0x68] sm:$0xff]
    %v235 = vld [vmem:[#allocation2 + $0x70] sm:$0xff]
    %v236 = vld [vmem:[#allocation2 + $0x78] sm:$0xff]
    %v237 = vld [vmem:[#allocation2 + $0x80] sm:$0xff]
    %v238 = vld [vmem:[#allocation2 + $0x88] sm:$0xff]
    %v240 = vcombine.low %v220, %v220
    %v242 = vunpack.c.l.s4 1966171168
    %v243 = vunpack.c.0.s8 %v242
    %v244 = vlaneseq
    %v245 = vshrl.u32 %v244, 7
    %v246 = vsub.s32 %v243, %v245
    %v247 = vrot.slane %v240, %v246
    %v248 = vcombine.low %v247, %v247
    %v249 = vcombine.high %v247, %v247
    %v251 = vunpack.c.l.s4 1966171168
    %v252 = vunpack.c.0.s8 %v251
    %v253 = vlaneseq
    %v254 = vshrl.u32 %v253, 7
    %v255 = vsub.s32 %v252, %v254
    %v256 = vrot.slane %v248, %v255
    %v258 = vunpack.c.l.s4 1966171168
    %v259 = vunpack.c.0.s8 %v258
    %v260 = vlaneseq
    %v261 = vshrl.u32 %v260, 7
    %v262 = vsub.s32 %v259, %v261
    %v263 = vrot.slane %v249, %v262
    %v264 = vcombine.low %v256, %v256
    %v265 = vcombine.low %v263, %v263
    %v267 = vunpack.c.l.s4 1966171168
    %v268 = vunpack.c.0.s8 %v267
    %v269 = vlaneseq
    %v270 = vshrl.u32 %v269, 7
    %v271 = vsub.s32 %v268, %v270
    %v272 = vrot.slane %v220, %v271
    %v273 = vcombine.high %v272, %v272
    %v275 = vunpack.c.l.s4 1966171168
    %v276 = vunpack.c.0.s8 %v275
    %v277 = vlaneseq
    %v278 = vshrl.u32 %v277, 7
    %v279 = vsub.s32 %v276, %v278
    %v280 = vrot.slane %v272, %v279
    %v282 = vunpack.c.l.s4 1966171168
    %v283 = vunpack.c.0.s8 %v282
    %v284 = vlaneseq
    %v285 = vshrl.u32 %v284, 7
    %v286 = vsub.s32 %v283, %v285
    %v287 = vrot.slane %v273, %v286
    %v288 = vlaneseq
    %v289 = vshrl.u32 %v288, 7
    %v290 = vsub.s32 0, %v289
    %v291 = vrot.slane %v264, %v290
    %v292 = vlaneseq
    %v293 = vshrl.u32 %v292, 7
    %v294 = vsub.s32 1, %v293
    %v295 = vrot.slane %v264, %v294
    %v296 = vlaneseq
    %v297 = vshrl.u32 %v296, 7
    %v298 = vsub.s32 2, %v297
    %v299 = vrot.slane %v264, %v298
    %v300 = vlaneseq
    %v301 = vshrl.u32 %v300, 7
    %v302 = vsub.s32 3, %v301
    %v303 = vrot.slane %v264, %v302
    %v304 = vlaneseq
    %v305 = vshrl.u32 %v304, 7
    %v306 = vsub.s32 4, %v305
    %v307 = vrot.slane %v264, %v306
    %v308 = vlaneseq
    %v309 = vshrl.u32 %v308, 7
    %v310 = vsub.s32 5, %v309
    %v311 = vrot.slane %v264, %v310
    %v312 = vlaneseq
    %v313 = vshrl.u32 %v312, 7
    %v314 = vsub.s32 6, %v313
    %v315 = vrot.slane %v264, %v314
    %v316 = vlaneseq
    %v317 = vshrl.u32 %v316, 7
    %v318 = vsub.s32 7, %v317
    %v319 = vrot.slane %v264, %v318
    %v320 = vlaneseq
    %v321 = vshrl.u32 %v320, 7
    %v322 = vsub.s32 0, %v321
    %v323 = vrot.slane %v280, %v322
    %v324 = vlaneseq
    %v325 = vshrl.u32 %v324, 7
    %v326 = vsub.s32 0, %v325
    %v327 = vrot.slane %v265, %v326
    %v328 = vlaneseq
    %v329 = vshrl.u32 %v328, 7
    %v330 = vsub.s32 1, %v329
    %v331 = vrot.slane %v265, %v330
    %v332 = vlaneseq
    %v333 = vshrl.u32 %v332, 7
    %v334 = vsub.s32 2, %v333
    %v335 = vrot.slane %v265, %v334
    %v336 = vlaneseq
    %v337 = vshrl.u32 %v336, 7
    %v338 = vsub.s32 3, %v337
    %v339 = vrot.slane %v265, %v338
    %v340 = vlaneseq
    %v341 = vshrl.u32 %v340, 7
    %v342 = vsub.s32 4, %v341
    %v343 = vrot.slane %v265, %v342
    %v344 = vlaneseq
    %v345 = vshrl.u32 %v344, 7
    %v346 = vsub.s32 5, %v345
    %v347 = vrot.slane %v265, %v346
    %v348 = vlaneseq
    %v349 = vshrl.u32 %v348, 7
    %v350 = vsub.s32 6, %v349
    %v351 = vrot.slane %v265, %v350
    %v352 = vlaneseq
    %v353 = vshrl.u32 %v352, 7
    %v354 = vsub.s32 7, %v353
    %v355 = vrot.slane %v265, %v354
    %v356 = vlaneseq
    %v357 = vshrl.u32 %v356, 7
    %v358 = vsub.s32 0, %v357
    %v359 = vrot.slane %v287, %v358
    %v378 = vmul.f32 %v221, %v291
    %v379 = vmul.f32 %v222, %v295
    %v380 = vmul.f32 %v223, %v299
    %v381 = vmul.f32 %v224, %v303
    %v382 = vmul.f32 %v225, %v307
    %v383 = vmul.f32 %v226, %v311
    %v384 = vmul.f32 %v227, %v315
    %v385 = vmul.f32 %v228, %v319
    %v386 = vmul.f32 %v229, %v323
    %v387 = vmul.f32 %v230, %v291
    %v388 = vmul.f32 %v231, %v295
    %v389 = vmul.f32 %v232, %v299
    %v390 = vmul.f32 %v233, %v303
    %v391 = vmul.f32 %v234, %v307
    %v392 = vmul.f32 %v235, %v311
    %v393 = vmul.f32 %v236, %v315
    %v394 = vmul.f32 %v237, %v319
    %v395 = vmul.f32 %v238, %v323
    %v396 = vmul.f32 %v221, %v327
    %v397 = vmul.f32 %v222, %v331
    %v398 = vmul.f32 %v223, %v335
    %v399 = vmul.f32 %v224, %v339
    %v400 = vmul.f32 %v225, %v343
    %v401 = vmul.f32 %v226, %v347
    %v402 = vmul.f32 %v227, %v351
    %v403 = vmul.f32 %v228, %v355
    %v404 = vmul.f32 %v229, %v359
    %v405 = vmul.f32 %v230, %v327
    %v406 = vmul.f32 %v231, %v331
    %v407 = vmul.f32 %v232, %v335
    %v408 = vmul.f32 %v233, %v339
    %v409 = vmul.f32 %v234, %v343
    %v410 = vmul.f32 %v235, %v347
    %v411 = vmul.f32 %v236, %v351
    %v412 = vmul.f32 %v237, %v355
    %v413 = vmul.f32 %v238, %v359
    %v414 = vpack.c.bf16 %v387, %v378
    %v415 = vpack.c.bf16 %v388, %v379
    %v416 = vpack.c.bf16 %v389, %v380
    %v417 = vpack.c.bf16 %v390, %v381
    %v418 = vpack.c.bf16 %v391, %v382
    %v419 = vpack.c.bf16 %v392, %v383
    %v420 = vpack.c.bf16 %v393, %v384
    %v421 = vpack.c.bf16 %v394, %v385
    %v422 = vpack.c.bf16 %v395, %v386
    %v423 = vpack.c.bf16 %v405, %v396
    %v424 = vpack.c.bf16 %v406, %v397
    %v425 = vpack.c.bf16 %v407, %v398
    %v426 = vpack.c.bf16 %v408, %v399
    %v427 = vpack.c.bf16 %v409, %v400
    %v428 = vpack.c.bf16 %v410, %v401
    %v429 = vpack.c.bf16 %v411, %v402
    %v430 = vpack.c.bf16 %v412, %v403
    %v431 = vpack.c.bf16 %v413, %v404
    %v432 = vld [vmem:[#allocation5] sm:$0xf]
    %v433 = vld [vmem:[#allocation5 + $0x4] sm:$0xf]
    %v434 = vld [vmem:[#allocation5 + $0x8] sm:$0xf]
    %v435 = vld [vmem:[#allocation5 + $0xc] sm:$0xf]
    %v436 = vld [vmem:[#allocation5 + $0x10] sm:$0xf]
    %v437 = vld [vmem:[#allocation5 + $0x14] sm:$0xf]
    %v438 = vld [vmem:[#allocation5 + $0x18] sm:$0xf]
    %v439 = vld [vmem:[#allocation5 + $0x1c] sm:$0xf]
    %v440 = vld [vmem:[#allocation5 + $0x20] sm:$0xf]
    %v441 = vld [vmem:[#allocation5 + $0x24] sm:$0xf]
    %v442 = vld [vmem:[#allocation5 + $0x28] sm:$0xf]
    %v443 = vld [vmem:[#allocation5 + $0x2c] sm:$0xf]
    %v444 = vld [vmem:[#allocation5 + $0x30] sm:$0xf]
    %v445 = vld [vmem:[#allocation5 + $0x34] sm:$0xf]
    %v446 = vld [vmem:[#allocation5 + $0x38] sm:$0xf]
    %v447 = vld [vmem:[#allocation5 + $0x3c] sm:$0xf]
    %v448 = vld [vmem:[#allocation5 + $0x40] sm:$0xf]
    %v449 = vld [vmem:[#allocation5 + $0x44] sm:$0xf]
    %v450 = vld [vmem:[#allocation5 + $0x48] sm:$0xf]
    %v451 = vld [vmem:[#allocation5 + $0x4c] sm:$0xf]
    %v452 = vld [vmem:[#allocation5 + $0x50] sm:$0xf]
    %v453 = vld [vmem:[#allocation5 + $0x54] sm:$0xf]
    %v454 = vld [vmem:[#allocation5 + $0x58] sm:$0xf]
    %v455 = vld [vmem:[#allocation5 + $0x5c] sm:$0xf]
    %v456 = vld [vmem:[#allocation5 + $0x60] sm:$0xf]
    %v457 = vld [vmem:[#allocation5 + $0x64] sm:$0xf]
    %v458 = vld [vmem:[#allocation5 + $0x68] sm:$0xf]
    %v459 = vld [vmem:[#allocation5 + $0x6c] sm:$0xf]
    %v460 = vld [vmem:[#allocation5 + $0x70] sm:$0xf]
    %v461 = vld [vmem:[#allocation5 + $0x74] sm:$0xf]
    %v462 = vld [vmem:[#allocation5 + $0x78] sm:$0xf]
    %v463 = vld [vmem:[#allocation5 + $0x7c] sm:$0xf]
    %v464 = vld [vmem:[#allocation5 + $0x80] sm:$0xf]
    %v465 = vld [vmem:[#allocation5 + $0x84] sm:$0xf]
    %v466 = vld [vmem:[#allocation5 + $0x88] sm:$0xf]
    %v467 = vld [vmem:[#allocation5 + $0x8c] sm:$0xf]
    %v468 = vld [vmem:[#allocation5 + $0x90] sm:$0xf]
    %v469 = vld [vmem:[#allocation5 + $0x94] sm:$0xf]
    %v470 = vld [vmem:[#allocation5 + $0x98] sm:$0xf]
    %v471 = vld [vmem:[#allocation5 + $0x9c] sm:$0xf]
    %v472 = vld [vmem:[#allocation5 + $0xa0] sm:$0xf]
    %v473 = vld [vmem:[#allocation5 + $0xa4] sm:$0xf]
    %v474 = vld [vmem:[#allocation5 + $0xa8] sm:$0xf]
    %v475 = vld [vmem:[#allocation5 + $0xac] sm:$0xf]
    %v476 = vld [vmem:[#allocation5 + $0xb0] sm:$0xf]
    %v477 = vld [vmem:[#allocation5 + $0xb4] sm:$0xf]
    %v478 = vld [vmem:[#allocation5 + $0xb8] sm:$0xf]
    %v479 = vld [vmem:[#allocation5 + $0xbc] sm:$0xf]
    %v480 = vld [vmem:[#allocation5 + $0xc0] sm:$0xf]
    %v481 = vld [vmem:[#allocation5 + $0xc4] sm:$0xf]
    %v482 = vld [vmem:[#allocation5 + $0xc8] sm:$0xf]
    %v483 = vld [vmem:[#allocation5 + $0xcc] sm:$0xf]
    %v484 = vld [vmem:[#allocation5 + $0xd0] sm:$0xf]
    %v485 = vld [vmem:[#allocation5 + $0xd4] sm:$0xf]
    %v486 = vld [vmem:[#allocation5 + $0xd8] sm:$0xf]
    %v487 = vld [vmem:[#allocation5 + $0xdc] sm:$0xf]
    %v488 = vld [vmem:[#allocation5 + $0xe0] sm:$0xf]
    %v489 = vld [vmem:[#allocation5 + $0xe4] sm:$0xf]
    %v490 = vld [vmem:[#allocation5 + $0xe8] sm:$0xf]
    %v491 = vld [vmem:[#allocation5 + $0xec] sm:$0xf]
    %v492 = vld [vmem:[#allocation5 + $0xf0] sm:$0xf]
    %v493 = vld [vmem:[#allocation5 + $0xf4] sm:$0xf]
    %v494 = vld [vmem:[#allocation5 + $0xf8] sm:$0xf]
    %v495 = vld [vmem:[#allocation5 + $0xfc] sm:$0xf]
    %v496 = vld [vmem:[#allocation5 + $0x100] sm:$0xf]
    %v497 = vld [vmem:[#allocation5 + $0x104] sm:$0xf]
    %v498 = vld [vmem:[#allocation5 + $0x108] sm:$0xf]
    %v499 = vld [vmem:[#allocation5 + $0x10c] sm:$0xf]
    %v500 = vld [vmem:[#allocation5 + $0x110] sm:$0xf]
    %v501 = vld [vmem:[#allocation5 + $0x114] sm:$0xf]
    %v502 = vld [vmem:[#allocation5 + $0x118] sm:$0xf]
    %v503 = vld [vmem:[#allocation5 + $0x11c] sm:$0xf]
    %v504 = vld [vmem:[#allocation5 + $0x120] sm:$0xf]
    %v505 = vld [vmem:[#allocation5 + $0x124] sm:$0xf]
    %v506 = vld [vmem:[#allocation5 + $0x128] sm:$0xf]
    %v507 = vld [vmem:[#allocation5 + $0x12c] sm:$0xf]
    %v508 = vld [vmem:[#allocation5 + $0x130] sm:$0xf]
    %v509 = vld [vmem:[#allocation5 + $0x134] sm:$0xf]
    %v510 = vld [vmem:[#allocation5 + $0x138] sm:$0xf]
    %v511 = vld [vmem:[#allocation5 + $0x13c] sm:$0xf]
    %v512 = vld [vmem:[#allocation5 + $0x140] sm:$0xf]
    %v513 = vld [vmem:[#allocation5 + $0x144] sm:$0xf]
    %v514 = vld [vmem:[#allocation5 + $0x148] sm:$0xf]
    %v515 = vld [vmem:[#allocation5 + $0x14c] sm:$0xf]
    %v516 = vld [vmem:[#allocation5 + $0x150] sm:$0xf]
    %v517 = vld [vmem:[#allocation5 + $0x154] sm:$0xf]
    %v518 = vld [vmem:[#allocation5 + $0x158] sm:$0xf]
    %v519 = vld [vmem:[#allocation5 + $0x15c] sm:$0xf]
    %v520 = vld [vmem:[#allocation5 + $0x160] sm:$0xf]
    %v521 = vld [vmem:[#allocation5 + $0x164] sm:$0xf]
    %v522 = vld [vmem:[#allocation5 + $0x168] sm:$0xf]
    %v523 = vld [vmem:[#allocation5 + $0x16c] sm:$0xf]
    %v524 = vld [vmem:[#allocation5 + $0x170] sm:$0xf]
    %v525 = vld [vmem:[#allocation5 + $0x174] sm:$0xf]
    %v526 = vld [vmem:[#allocation5 + $0x178] sm:$0xf]
    %v527 = vld [vmem:[#allocation5 + $0x17c] sm:$0xf]
    %v528 = vld [vmem:[#allocation5 + $0x180] sm:$0xf]
    %v529 = vld [vmem:[#allocation5 + $0x184] sm:$0xf]
    %v530 = vld [vmem:[#allocation5 + $0x188] sm:$0xf]
    %v531 = vld [vmem:[#allocation5 + $0x18c] sm:$0xf]
    %v532 = vld [vmem:[#allocation5 + $0x190] sm:$0xf]
    %v533 = vld [vmem:[#allocation5 + $0x194] sm:$0xf]
    %v534 = vld [vmem:[#allocation5 + $0x198] sm:$0xf]
    %v535 = vld [vmem:[#allocation5 + $0x19c] sm:$0xf]
    %v536 = vld [vmem:[#allocation5 + $0x1a0] sm:$0xf]
    %v537 = vld [vmem:[#allocation5 + $0x1a4] sm:$0xf]
    %v538 = vld [vmem:[#allocation5 + $0x1a8] sm:$0xf]
    %v539 = vld [vmem:[#allocation5 + $0x1ac] sm:$0xf]
    %v540 = vld [vmem:[#allocation5 + $0x1b0] sm:$0xf]
    %v541 = vld [vmem:[#allocation5 + $0x1b4] sm:$0xf]
    %v542 = vld [vmem:[#allocation5 + $0x1b8] sm:$0xf]
    %v543 = vld [vmem:[#allocation5 + $0x1bc] sm:$0xf]
    %v544 = vld [vmem:[#allocation5 + $0x1c0] sm:$0xf]
    %v545 = vld [vmem:[#allocation5 + $0x1c4] sm:$0xf]
    %v546 = vld [vmem:[#allocation5 + $0x1c8] sm:$0xf]
    %v547 = vld [vmem:[#allocation5 + $0x1cc] sm:$0xf]
    %v548 = vld [vmem:[#allocation5 + $0x1d0] sm:$0xf]
    %v549 = vld [vmem:[#allocation5 + $0x1d4] sm:$0xf]
    %v550 = vld [vmem:[#allocation5 + $0x1d8] sm:$0xf]
    %v551 = vld [vmem:[#allocation5 + $0x1dc] sm:$0xf]
    %v552 = vld [vmem:[#allocation5 + $0x1e0] sm:$0xf]
    %v553 = vld [vmem:[#allocation5 + $0x1e4] sm:$0xf]
    %v554 = vld [vmem:[#allocation5 + $0x1e8] sm:$0xf]
    %v555 = vld [vmem:[#allocation5 + $0x1ec] sm:$0xf]
    %v556 = vld [vmem:[#allocation5 + $0x1f0] sm:$0xf]
    %v557 = vld [vmem:[#allocation5 + $0x1f4] sm:$0xf]
    %v558 = vld [vmem:[#allocation5 + $0x1f8] sm:$0xf]
    %v559 = vld [vmem:[#allocation5 + $0x1fc] sm:$0xf]
    %v560 = vld [vmem:[#allocation5 + $0x200] sm:$0xf]
    %v561 = vld [vmem:[#allocation5 + $0x204] sm:$0xf]
    %v562 = vld [vmem:[#allocation5 + $0x208] sm:$0xf]
    %v563 = vld [vmem:[#allocation5 + $0x20c] sm:$0xf]
    %v564 = vld [vmem:[#allocation5 + $0x210] sm:$0xf]
    %v565 = vld [vmem:[#allocation5 + $0x214] sm:$0xf]
    %v566 = vld [vmem:[#allocation5 + $0x218] sm:$0xf]
    %v567 = vld [vmem:[#allocation5 + $0x21c] sm:$0xf]
    %v568 = vld [vmem:[#allocation5 + $0x220] sm:$0xf]
    %v569 = vld [vmem:[#allocation5 + $0x224] sm:$0xf]
    %v570 = vld [vmem:[#allocation5 + $0x228] sm:$0xf]
    %v571 = vld [vmem:[#allocation5 + $0x22c] sm:$0xf]
    %v572 = vld [vmem:[#allocation5 + $0x230] sm:$0xf]
    %v573 = vld [vmem:[#allocation5 + $0x234] sm:$0xf]
    %v574 = vld [vmem:[#allocation5 + $0x238] sm:$0xf]
    %v575 = vld [vmem:[#allocation5 + $0x23c] sm:$0xf]
    %v720 = vunpack.c.l.b16 %v432
    %v721 = vunpack.c.l.b16 %v433
    %v722 = vunpack.c.l.b16 %v434
    %v723 = vunpack.c.l.b16 %v435
    %v724 = vunpack.c.l.b16 %v436
    %v725 = vunpack.c.l.b16 %v437
    %v726 = vunpack.c.l.b16 %v438
    %v727 = vunpack.c.l.b16 %v439
    %v728 = vunpack.c.l.b16 %v440
    %v729 = vunpack.c.l.b16 %v441
    %v730 = vunpack.c.l.b16 %v442
    %v731 = vunpack.c.l.b16 %v443
    %v732 = vunpack.c.l.b16 %v444
    %v733 = vunpack.c.l.b16 %v445
    %v734 = vunpack.c.l.b16 %v446
    %v735 = vunpack.c.l.b16 %v447
    %v736 = vunpack.c.l.b16 %v448
    %v737 = vunpack.c.l.b16 %v449
    %v738 = vunpack.c.l.b16 %v450
    %v739 = vunpack.c.l.b16 %v451
    %v740 = vunpack.c.l.b16 %v452
    %v741 = vunpack.c.l.b16 %v453
    %v742 = vunpack.c.l.b16 %v454
    %v743 = vunpack.c.l.b16 %v455
    %v744 = vunpack.c.l.b16 %v456
    %v745 = vunpack.c.l.b16 %v457
    %v746 = vunpack.c.l.b16 %v458
    %v747 = vunpack.c.l.b16 %v459
    %v748 = vunpack.c.l.b16 %v460
    %v749 = vunpack.c.l.b16 %v461
    %v750 = vunpack.c.l.b16 %v462
    %v751 = vunpack.c.l.b16 %v463
    %v752 = vunpack.c.l.b16 %v464
    %v753 = vunpack.c.l.b16 %v465
    %v754 = vunpack.c.l.b16 %v466
    %v755 = vunpack.c.l.b16 %v467
    %v756 = vunpack.c.l.b16 %v468
    %v757 = vunpack.c.l.b16 %v469
    %v758 = vunpack.c.l.b16 %v470
    %v759 = vunpack.c.l.b16 %v471
    %v760 = vunpack.c.l.b16 %v472
    %v761 = vunpack.c.l.b16 %v473
    %v762 = vunpack.c.l.b16 %v474
    %v763 = vunpack.c.l.b16 %v475
    %v764 = vunpack.c.l.b16 %v476
    %v765 = vunpack.c.l.b16 %v477
    %v766 = vunpack.c.l.b16 %v478
    %v767 = vunpack.c.l.b16 %v479
    %v768 = vunpack.c.l.b16 %v480
    %v769 = vunpack.c.l.b16 %v481
    %v770 = vunpack.c.l.b16 %v482
    %v771 = vunpack.c.l.b16 %v483
    %v772 = vunpack.c.l.b16 %v484
    %v773 = vunpack.c.l.b16 %v485
    %v774 = vunpack.c.l.b16 %v486
    %v775 = vunpack.c.l.b16 %v487
    %v776 = vunpack.c.l.b16 %v488
    %v777 = vunpack.c.l.b16 %v489
    %v778 = vunpack.c.l.b16 %v490
    %v779 = vunpack.c.l.b16 %v491
    %v780 = vunpack.c.l.b16 %v492
    %v781 = vunpack.c.l.b16 %v493
    %v782 = vunpack.c.l.b16 %v494
    %v783 = vunpack.c.l.b16 %v495
    %v784 = vunpack.c.l.b16 %v496
    %v785 = vunpack.c.l.b16 %v497
    %v786 = vunpack.c.l.b16 %v498
    %v787 = vunpack.c.l.b16 %v499
    %v788 = vunpack.c.l.b16 %v500
    %v789 = vunpack.c.l.b16 %v501
    %v790 = vunpack.c.l.b16 %v502
    %v791 = vunpack.c.l.b16 %v503
    %v792 = vunpack.c.l.b16 %v504
    %v793 = vunpack.c.l.b16 %v505
    %v794 = vunpack.c.l.b16 %v506
    %v795 = vunpack.c.l.b16 %v507
    %v796 = vunpack.c.l.b16 %v508
    %v797 = vunpack.c.l.b16 %v509
    %v798 = vunpack.c.l.b16 %v510
    %v799 = vunpack.c.l.b16 %v511
    %v800 = vunpack.c.l.b16 %v512
    %v801 = vunpack.c.l.b16 %v513
    %v802 = vunpack.c.l.b16 %v514
    %v803 = vunpack.c.l.b16 %v515
    %v804 = vunpack.c.l.b16 %v516
    %v805 = vunpack.c.l.b16 %v517
    %v806 = vunpack.c.l.b16 %v518
    %v807 = vunpack.c.l.b16 %v519
    %v808 = vunpack.c.l.b16 %v520
    %v809 = vunpack.c.l.b16 %v521
    %v810 = vunpack.c.l.b16 %v522
    %v811 = vunpack.c.l.b16 %v523
    %v812 = vunpack.c.l.b16 %v524
    %v813 = vunpack.c.l.b16 %v525
    %v814 = vunpack.c.l.b16 %v526
    %v815 = vunpack.c.l.b16 %v527
    %v816 = vunpack.c.l.b16 %v528
    %v817 = vunpack.c.l.b16 %v529
    %v818 = vunpack.c.l.b16 %v530
    %v819 = vunpack.c.l.b16 %v531
    %v820 = vunpack.c.l.b16 %v532
    %v821 = vunpack.c.l.b16 %v533
    %v822 = vunpack.c.l.b16 %v534
    %v823 = vunpack.c.l.b16 %v535
    %v824 = vunpack.c.l.b16 %v536
    %v825 = vunpack.c.l.b16 %v537
    %v826 = vunpack.c.l.b16 %v538
    %v827 = vunpack.c.l.b16 %v539
    %v828 = vunpack.c.l.b16 %v540
    %v829 = vunpack.c.l.b16 %v541
    %v830 = vunpack.c.l.b16 %v542
    %v831 = vunpack.c.l.b16 %v543
    %v832 = vunpack.c.l.b16 %v544
    %v833 = vunpack.c.l.b16 %v545
    %v834 = vunpack.c.l.b16 %v546
    %v835 = vunpack.c.l.b16 %v547
    %v836 = vunpack.c.l.b16 %v548
    %v837 = vunpack.c.l.b16 %v549
    %v838 = vunpack.c.l.b16 %v550
    %v839 = vunpack.c.l.b16 %v551
    %v840 = vunpack.c.l.b16 %v552
    %v841 = vunpack.c.l.b16 %v553
    %v842 = vunpack.c.l.b16 %v554
    %v843 = vunpack.c.l.b16 %v555
    %v844 = vunpack.c.l.b16 %v556
    %v845 = vunpack.c.l.b16 %v557
    %v846 = vunpack.c.l.b16 %v558
    %v847 = vunpack.c.l.b16 %v559
    %v848 = vunpack.c.l.b16 %v560
    %v849 = vunpack.c.l.b16 %v561
    %v850 = vunpack.c.l.b16 %v562
    %v851 = vunpack.c.l.b16 %v563
    %v852 = vunpack.c.l.b16 %v564
    %v853 = vunpack.c.l.b16 %v565
    %v854 = vunpack.c.l.b16 %v566
    %v855 = vunpack.c.l.b16 %v567
    %v856 = vunpack.c.l.b16 %v568
    %v857 = vunpack.c.l.b16 %v569
    %v858 = vunpack.c.l.b16 %v570
    %v859 = vunpack.c.l.b16 %v571
    %v860 = vunpack.c.l.b16 %v572
    %v861 = vunpack.c.l.b16 %v573
    %v862 = vunpack.c.l.b16 %v574
    %v863 = vunpack.c.l.b16 %v575
    %v864 = vpack.c.b16 %v721, %v720
    %v865 = vpack.c.b16 %v723, %v722
    %v866 = vpack.c.b16 %v725, %v724
    %v867 = vpack.c.b16 %v727, %v726
    %v868 = vpack.c.b16 %v729, %v728
    %v869 = vpack.c.b16 %v731, %v730
    %v870 = vpack.c.b16 %v733, %v732
    %v871 = vpack.c.b16 %v735, %v734
    %v872 = vpack.c.b16 %v737, %v736
    %v873 = vpack.c.b16 %v739, %v738
    %v874 = vpack.c.b16 %v741, %v740
    %v875 = vpack.c.b16 %v743, %v742
    %v876 = vpack.c.b16 %v745, %v744
    %v877 = vpack.c.b16 %v747, %v746
    %v878 = vpack.c.b16 %v749, %v748
    %v879 = vpack.c.b16 %v751, %v750
    %v880 = vpack.c.b16 %v753, %v752
    %v881 = vpack.c.b16 %v755, %v754
    %v882 = vpack.c.b16 %v757, %v756
    %v883 = vpack.c.b16 %v759, %v758
    %v884 = vpack.c.b16 %v761, %v760
    %v885 = vpack.c.b16 %v763, %v762
    %v886 = vpack.c.b16 %v765, %v764
    %v887 = vpack.c.b16 %v767, %v766
    %v888 = vpack.c.b16 %v769, %v768
    %v889 = vpack.c.b16 %v771, %v770
    %v890 = vpack.c.b16 %v773, %v772
    %v891 = vpack.c.b16 %v775, %v774
    %v892 = vpack.c.b16 %v777, %v776
    %v893 = vpack.c.b16 %v779, %v778
    %v894 = vpack.c.b16 %v781, %v780
    %v895 = vpack.c.b16 %v783, %v782
    %v896 = vpack.c.b16 %v785, %v784
    %v897 = vpack.c.b16 %v787, %v786
    %v898 = vpack.c.b16 %v789, %v788
    %v899 = vpack.c.b16 %v791, %v790
    %v900 = vpack.c.b16 %v793, %v792
    %v901 = vpack.c.b16 %v795, %v794
    %v902 = vpack.c.b16 %v797, %v796
    %v903 = vpack.c.b16 %v799, %v798
    %v904 = vpack.c.b16 %v801, %v800
    %v905 = vpack.c.b16 %v803, %v802
    %v906 = vpack.c.b16 %v805, %v804
    %v907 = vpack.c.b16 %v807, %v806
    %v908 = vpack.c.b16 %v809, %v808
    %v909 = vpack.c.b16 %v811, %v810
    %v910 = vpack.c.b16 %v813, %v812
    %v911 = vpack.c.b16 %v815, %v814
    %v912 = vpack.c.b16 %v817, %v816
    %v913 = vpack.c.b16 %v819, %v818
    %v914 = vpack.c.b16 %v821, %v820
    %v915 = vpack.c.b16 %v823, %v822
    %v916 = vpack.c.b16 %v825, %v824
    %v917 = vpack.c.b16 %v827, %v826
    %v918 = vpack.c.b16 %v829, %v828
    %v919 = vpack.c.b16 %v831, %v830
    %v920 = vpack.c.b16 %v833, %v832
    %v921 = vpack.c.b16 %v835, %v834
    %v922 = vpack.c.b16 %v837, %v836
    %v923 = vpack.c.b16 %v839, %v838
    %v924 = vpack.c.b16 %v841, %v840
    %v925 = vpack.c.b16 %v843, %v842
    %v926 = vpack.c.b16 %v845, %v844
    %v927 = vpack.c.b16 %v847, %v846
    %v928 = vpack.c.b16 %v849, %v848
    %v929 = vpack.c.b16 %v851, %v850
    %v930 = vpack.c.b16 %v853, %v852
    %v931 = vpack.c.b16 %v855, %v854
    %v932 = vpack.c.b16 %v857, %v856
    %v933 = vpack.c.b16 %v859, %v858
    %v934 = vpack.c.b16 %v861, %v860
    %v935 = vpack.c.b16 %v863, %v862
    %1008 = vmatprep.subr.bf16.mxu0 0
    %1009 = vmatpush1.bf16.msra.mxu0 %v864
    %1010 = vmatprep.subr.bf16.mxu0 0
    %1011 = vmatpush1.bf16.msra.mxu0 %v865
    %1012 = vmatprep.subr.bf16.mxu0 0
    %1013 = vmatpush1.bf16.msra.mxu0 %v866
    %1014 = vmatprep.subr.bf16.mxu0 0
    %1015 = vmatpush1.bf16.msra.mxu0 %v867
    %1016 = vmatprep.subr.bf16.mxu0 0
    %1017 = vmatpush1.bf16.msra.mxu0 %v868
    %1018 = vmatprep.subr.bf16.mxu0 0
    %1019 = vmatpush1.bf16.msra.mxu0 %v869
    %1020 = vmatprep.subr.bf16.mxu0 0
    %1021 = vmatpush1.bf16.msra.mxu0 %v870
    %1022 = vmatprep.subr.bf16.mxu0 0
    %1023 = vmatpush1.bf16.msra.mxu0 %v871
    %1024 = vmatprep.subr.bf16.mxu0 0
    %1025 = vmatpush1.bf16.msra.mxu0 %v872
    %1026 = vmatprep.subr.bf16.mxu0 0
    %1027 = vmatpush1.bf16.msra.mxu0 %v873
    %1028 = vmatprep.subr.bf16.mxu0 0
    %1029 = vmatpush1.bf16.msra.mxu0 %v874
    %1030 = vmatprep.subr.bf16.mxu0 0
    %1031 = vmatpush1.bf16.msra.mxu0 %v875
    %1032 = vmatprep.subr.bf16.mxu0 0
    %1033 = vmatpush1.bf16.msra.mxu0 %v876
    %1034 = vmatprep.subr.bf16.mxu0 0
    %1035 = vmatpush1.bf16.msra.mxu0 %v877
    %1036 = vmatprep.subr.bf16.mxu0 0
    %1037 = vmatpush1.bf16.msra.mxu0 %v878
    %1038 = vmatprep.subr.bf16.mxu0 0
    %1039 = vmatpush1.bf16.msra.mxu0 %v879
    %1040 = vmatprep.mubr.bf16.mxu0 %v415
    %1041 = vmatmul.mubr.bf16.gmra.mrb[0].mxu0 %v414
    %v1042 = vpop.f32.mrb[0].mxu0
    %v1043 = vadd.f32 0.0, %v1042
    %v1044 = vpop.f32.mrb[0].mxu0
    %v1045 = vpop.f32.mrb[0].mxu0
    %v1046 = vadd.f32 0.0, %v1045
    %v1047 = vpop.f32.mrb[0].mxu0
    %1048 = vmatprep.mubr.bf16.mxu0 %v424
    %1049 = vmatmul.mubr.bf16.gmra.mrb[0].mxu0 %v423
    %v1050 = vpop.f32.mrb[0].mxu0
    %v1051 = vadd.f32 0.0, %v1050
    %v1052 = vpop.f32.mrb[0].mxu0
    %v1053 = vpop.f32.mrb[0].mxu0
    %v1054 = vadd.f32 0.0, %v1053
    %v1055 = vpop.f32.mrb[0].mxu0
    %1056 = vdwg.mxu0
    %1057 = vmatprep.subr.bf16.mxu0 0
    %1058 = vmatpush1.bf16.msra.mxu0 %v880
    %1059 = vmatprep.subr.bf16.mxu0 0
    %1060 = vmatpush1.bf16.msra.mxu0 %v881
    %1061 = vmatprep.subr.bf16.mxu0 0
    %1062 = vmatpush1.bf16.msra.mxu0 %v882
    %1063 = vmatprep.subr.bf16.mxu0 0
    %1064 = vmatpush1.bf16.msra.mxu0 %v883
    %1065 = vmatprep.subr.bf16.mxu0 0
    %1066 = vmatpush1.bf16.msra.mxu0 %v884
    %1067 = vmatprep.subr.bf16.mxu0 0
    %1068 = vmatpush1.bf16.msra.mxu0 %v885
    %1069 = vmatprep.subr.bf16.mxu0 0
    %1070 = vmatpush1.bf16.msra.mxu0 %v886
    %1071 = vmatprep.subr.bf16.mxu0 0
    %1072 = vmatpush1.bf16.msra.mxu0 %v887
    %1073 = vmatprep.subr.bf16.mxu0 0
    %1074 = vmatpush1.bf16.msra.mxu0 %v888
    %1075 = vmatprep.subr.bf16.mxu0 0
    %1076 = vmatpush1.bf16.msra.mxu0 %v889
    %1077 = vmatprep.subr.bf16.mxu0 0
    %1078 = vmatpush1.bf16.msra.mxu0 %v890
    %1079 = vmatprep.subr.bf16.mxu0 0
    %1080 = vmatpush1.bf16.msra.mxu0 %v891
    %1081 = vmatprep.subr.bf16.mxu0 0
    %1082 = vmatpush1.bf16.msra.mxu0 %v892
    %1083 = vmatprep.subr.bf16.mxu0 0
    %1084 = vmatpush1.bf16.msra.mxu0 %v893
    %1085 = vmatprep.subr.bf16.mxu0 0
    %1086 = vmatpush1.bf16.msra.mxu0 %v894
    %1087 = vmatprep.subr.bf16.mxu0 0
    %1088 = vmatpush1.bf16.msra.mxu0 %v895
    %1089 = vmatprep.mubr.bf16.mxu0 %v417
    %1090 = vmatmul.mubr.bf16.gmra.mrb[0].mxu0 %v416
    %v1091 = vpop.f32.mrb[0].mxu0
    %v1092 = vadd.f32 %v1043, %v1091
    %v1093 = vpop.f32.mrb[0].mxu0
    %v1094 = vpop.f32.mrb[0].mxu0
    %v1095 = vadd.f32 %v1046, %v1094
    %v1096 = vpop.f32.mrb[0].mxu0
    %1097 = vmatprep.mubr.bf16.mxu0 %v426
    %1098 = vmatmul.mubr.bf16.gmra.mrb[0].mxu0 %v425
    %v1099 = vpop.f32.mrb[0].mxu0
    %v1100 = vadd.f32 %v1051, %v1099
    %v1101 = vpop.f32.mrb[0].mxu0
    %v1102 = vpop.f32.mrb[0].mxu0
    %v1103 = vadd.f32 %v1054, %v1102
    %v1104 = vpop.f32.mrb[0].mxu0
    %1105 = vdwg.mxu0
    %1106 = vmatprep.subr.bf16.mxu0 0
    %1107 = vmatpush1.bf16.msra.mxu0 %v896
    %1108 = vmatprep.subr.bf16.mxu0 0
    %1109 = vmatpush1.bf16.msra.mxu0 %v897
    %1110 = vmatprep.subr.bf16.mxu0 0
    %1111 = vmatpush1.bf16.msra.mxu0 %v898
    %1112 = vmatprep.subr.bf16.mxu0 0
    %1113 = vmatpush1.bf16.msra.mxu0 %v899
    %1114 = vmatprep.subr.bf16.mxu0 0
    %1115 = vmatpush1.bf16.msra.mxu0 %v900
    %1116 = vmatprep.subr.bf16.mxu0 0
    %1117 = vmatpush1.bf16.msra.mxu0 %v901
    %1118 = vmatprep.subr.bf16.mxu0 0
    %1119 = vmatpush1.bf16.msra.mxu0 %v902
    %1120 = vmatprep.subr.bf16.mxu0 0
    %1121 = vmatpush1.bf16.msra.mxu0 %v903
    %1122 = vmatprep.subr.bf16.mxu0 0
    %1123 = vmatpush1.bf16.msra.mxu0 %v904
    %1124 = vmatprep.subr.bf16.mxu0 0
    %1125 = vmatpush1.bf16.msra.mxu0 %v905
    %1126 = vmatprep.subr.bf16.mxu0 0
    %1127 = vmatpush1.bf16.msra.mxu0 %v906
    %1128 = vmatprep.subr.bf16.mxu0 0
    %1129 = vmatpush1.bf16.msra.mxu0 %v907
    %1130 = vmatprep.subr.bf16.mxu0 0
    %1131 = vmatpush1.bf16.msra.mxu0 %v908
    %1132 = vmatprep.subr.bf16.mxu0 0
    %1133 = vmatpush1.bf16.msra.mxu0 %v909
    %1134 = vmatprep.subr.bf16.mxu0 0
    %1135 = vmatpush1.bf16.msra.mxu0 %v910
    %1136 = vmatprep.subr.bf16.mxu0 0
    %1137 = vmatpush1.bf16.msra.mxu0 %v911
    %1138 = vmatprep.mubr.bf16.mxu0 %v419
    %1139 = vmatmul.mubr.bf16.gmra.mrb[0].mxu0 %v418
    %v1140 = vpop.f32.mrb[0].mxu0
    %v1141 = vadd.f32 %v1092, %v1140
    %v1142 = vpop.f32.mrb[0].mxu0
    %v1143 = vpop.f32.mrb[0].mxu0
    %v1144 = vadd.f32 %v1095, %v1143
    %v1145 = vpop.f32.mrb[0].mxu0
    %1146 = vmatprep.mubr.bf16.mxu0 %v428
    %1147 = vmatmul.mubr.bf16.gmra.mrb[0].mxu0 %v427
    %v1148 = vpop.f32.mrb[0].mxu0
    %v1149 = vadd.f32 %v1100, %v1148
    %v1150 = vpop.f32.mrb[0].mxu0
    %v1151 = vpop.f32.mrb[0].mxu0
    %v1152 = vadd.f32 %v1103, %v1151
    %v1153 = vpop.f32.mrb[0].mxu0
    %1154 = vdwg.mxu0
    %1155 = vmatprep.subr.bf16.mxu0 0
    %1156 = vmatpush1.bf16.msra.mxu0 %v912
    %1157 = vmatprep.subr.bf16.mxu0 0
    %1158 = vmatpush1.bf16.msra.mxu0 %v913
    %1159 = vmatprep.subr.bf16.mxu0 0
    %1160 = vmatpush1.bf16.msra.mxu0 %v914
    %1161 = vmatprep.subr.bf16.mxu0 0
    %1162 = vmatpush1.bf16.msra.mxu0 %v915
    %1163 = vmatprep.subr.bf16.mxu0 0
    %1164 = vmatpush1.bf16.msra.mxu0 %v916
    %1165 = vmatprep.subr.bf16.mxu0 0
    %1166 = vmatpush1.bf16.msra.mxu0 %v917
    %1167 = vmatprep.subr.bf16.mxu0 0
    %1168 = vmatpush1.bf16.msra.mxu0 %v918
    %1169 = vmatprep.subr.bf16.mxu0 0
    %1170 = vmatpush1.bf16.msra.mxu0 %v919
    %1171 = vmatprep.subr.bf16.mxu0 0
    %1172 = vmatpush1.bf16.msra.mxu0 %v920
    %1173 = vmatprep.subr.bf16.mxu0 0
    %1174 = vmatpush1.bf16.msra.mxu0 %v921
    %1175 = vmatprep.subr.bf16.mxu0 0
    %1176 = vmatpush1.bf16.msra.mxu0 %v922
    %1177 = vmatprep.subr.bf16.mxu0 0
    %1178 = vmatpush1.bf16.msra.mxu0 %v923
    %1179 = vmatprep.subr.bf16.mxu0 0
    %1180 = vmatpush1.bf16.msra.mxu0 %v924
    %1181 = vmatprep.subr.bf16.mxu0 0
    %1182 = vmatpush1.bf16.msra.mxu0 %v925
    %1183 = vmatprep.subr.bf16.mxu0 0
    %1184 = vmatpush1.bf16.msra.mxu0 %v926
    %1185 = vmatprep.subr.bf16.mxu0 0
    %1186 = vmatpush1.bf16.msra.mxu0 %v927
    %1187 = vmatprep.mubr.bf16.mxu0 %v421
    %1188 = vmatmul.mubr.bf16.gmra.mrb[0].mxu0 %v420
    %v1189 = vpop.f32.mrb[0].mxu0
    %v1190 = vadd.f32 %v1141, %v1189
    %v1191 = vpop.f32.mrb[0].mxu0
    %v1192 = vpop.f32.mrb[0].mxu0
    %v1193 = vadd.f32 %v1144, %v1192
    %v1194 = vpop.f32.mrb[0].mxu0
    %1195 = vmatprep.mubr.bf16.mxu0 %v430
    %1196 = vmatmul.mubr.bf16.gmra.mrb[0].mxu0 %v429
    %v1197 = vpop.f32.mrb[0].mxu0
    %v1198 = vadd.f32 %v1149, %v1197
    %v1199 = vpop.f32.mrb[0].mxu0
    %v1200 = vpop.f32.mrb[0].mxu0
    %v1201 = vadd.f32 %v1152, %v1200
    %v1202 = vpop.f32.mrb[0].mxu0
    %1203 = vdwg.mxu0
    %1204 = vmatprep.subr.bf16.mxu0 0
    %1205 = vmatpush1.bf16.msra.mxu0 %v928
    %1206 = vmatprep.subr.bf16.mxu0 0
    %1207 = vmatpush1.bf16.msra.mxu0 %v929
    %1208 = vmatprep.subr.bf16.mxu0 0
    %1209 = vmatpush1.bf16.msra.mxu0 %v930
    %1210 = vmatprep.subr.bf16.mxu0 0
    %1211 = vmatpush1.bf16.msra.mxu0 %v931
    %1212 = vmatprep.subr.bf16.mxu0 0
    %1213 = vmatpush1.bf16.msra.mxu0 %v932
    %1214 = vmatprep.subr.bf16.mxu0 0
    %1215 = vmatpush1.bf16.msra.mxu0 %v933
    %1216 = vmatprep.subr.bf16.mxu0 0
    %1217 = vmatpush1.bf16.msra.mxu0 %v934
    %1218 = vmatprep.subr.bf16.mxu0 0
    %1219 = vmatpush1.bf16.msra.mxu0 %v935
    %1220 = vmatprep.subr.bf16.mxu0 0
    %1221 = vmatpush1.bf16.msra.mxu0 0
    %1222 = vmatprep.subr.bf16.mxu0 0
    %1223 = vmatpush1.bf16.msra.mxu0 0
    %1224 = vmatprep.subr.bf16.mxu0 0
    %1225 = vmatpush1.bf16.msra.mxu0 0
    %1226 = vmatprep.subr.bf16.mxu0 0
    %1227 = vmatpush1.bf16.msra.mxu0 0
    %1228 = vmatprep.subr.bf16.mxu0 0
    %1229 = vmatpush1.bf16.msra.mxu0 0
    %1230 = vmatprep.subr.bf16.mxu0 0
    %1231 = vmatpush1.bf16.msra.mxu0 0
    %1232 = vmatprep.subr.bf16.mxu0 0
    %1233 = vmatpush1.bf16.msra.mxu0 0
    %1234 = vmatprep.subr.bf16.mxu0 0
    %1235 = vmatpush1.bf16.msra.mxu0 0
    %1236 = vmatprep.mubr.bf16.mxu0 0
    %1237 = vmatmul.mubr.bf16.gmra.mrb[0].mxu0 %v422
    %v1238 = vpop.f32.mrb[0].mxu0
    %v1239 = vadd.f32 %v1190, %v1238
    %v1240 = vpop.f32.mrb[0].mxu0
    %v1241 = vpop.f32.mrb[0].mxu0
    %v1242 = vadd.f32 %v1193, %v1241
    %v1243 = vpop.f32.mrb[0].mxu0
    %1244 = vmatprep.mubr.bf16.mxu0 0
    %1245 = vmatmul.mubr.bf16.gmra.mrb[0].mxu0 %v431
    %v1246 = vpop.f32.mrb[0].mxu0
    %v1247 = vadd.f32 %v1198, %v1246
    %v1248 = vpop.f32.mrb[0].mxu0
    %v1249 = vpop.f32.mrb[0].mxu0
    %v1250 = vadd.f32 %v1201, %v1249
    %v1251 = vpop.f32.mrb[0].mxu0
    %1252 = vdwg.mxu0
    %v1253 = vmul.f32 %v220, %v220
    %v1254 = vld [vmem:[#allocation7] sm:$0xff]
    %v1255 = vld [vmem:[#allocation7 + $0x8] sm:$0xff]
    %v1256 = vld [vmem:[#allocation7 + $0x10] sm:$0xff]
    %v1257 = vld [vmem:[#allocation7 + $0x18] sm:$0xff]
    %v1258 = vld [vmem:[#allocation7 + $0x20] sm:$0xff]
    %v1259 = vld [vmem:[#allocation7 + $0x28] sm:$0xff]
    %v1260 = vld [vmem:[#allocation7 + $0x30] sm:$0xff]
    %v1261 = vld [vmem:[#allocation7 + $0x38] sm:$0xff]
    %v1262 = vld [vmem:[#allocation7 + $0x40] sm:$0xff]
    %v1263 = vld [vmem:[#allocation7 + $0x48] sm:$0xff]
    %v1264 = vld [vmem:[#allocation7 + $0x50] sm:$0xff]
    %v1265 = vld [vmem:[#allocation7 + $0x58] sm:$0xff]
    %v1266 = vld [vmem:[#allocation7 + $0x60] sm:$0xff]
    %v1267 = vld [vmem:[#allocation7 + $0x68] sm:$0xff]
    %v1268 = vld [vmem:[#allocation7 + $0x70] sm:$0xff]
    %v1269 = vld [vmem:[#allocation7 + $0x78] sm:$0xff]
    %1270 = vmatprep.subr.mxu0 0.0
    %1271 = vmatpush1.msra.mxu0 %v1254
    %1272 = vmatprep.subr.mxu0 0.0
    %1273 = vmatpush1.msra.mxu0 %v1255
    %1274 = vmatprep.subr.mxu0 0.0
    %1275 = vmatpush1.msra.mxu0 %v1256
    %1276 = vmatprep.subr.mxu0 0.0
    %1277 = vmatpush1.msra.mxu0 %v1257
    %1278 = vmatprep.subr.mxu0 0.0
    %1279 = vmatpush1.msra.mxu0 %v1258
    %1280 = vmatprep.subr.mxu0 0.0
    %1281 = vmatpush1.msra.mxu0 %v1259
    %1282 = vmatprep.subr.mxu0 0.0
    %1283 = vmatpush1.msra.mxu0 %v1260
    %1284 = vmatprep.subr.mxu0 0.0
    %1285 = vmatpush1.msra.mxu0 %v1261
    %1286 = vmatprep.subr.mxu0 0.0
    %1287 = vmatpush1.msra.mxu0 %v1262
    %1288 = vmatprep.subr.mxu0 0.0
    %1289 = vmatpush1.msra.mxu0 %v1263
    %1290 = vmatprep.subr.mxu0 0.0
    %1291 = vmatpush1.msra.mxu0 %v1264
    %1292 = vmatprep.subr.mxu0 0.0
    %1293 = vmatpush1.msra.mxu0 %v1265
    %1294 = vmatprep.subr.mxu0 0.0
    %1295 = vmatpush1.msra.mxu0 %v1266
    %1296 = vmatprep.subr.mxu0 0.0
    %1297 = vmatpush1.msra.mxu0 %v1267
    %1298 = vmatprep.subr.mxu0 0.0
    %1299 = vmatpush1.msra.mxu0 %v1268
    %1300 = vmatprep.subr.mxu0 0.0
    %1301 = vmatpush1.msra.mxu0 %v1269
    %1302 = vmatprep.subr.mxu0 0.0
    %1303 = vmatpush1.msra.mxu0 0.0
    %1304 = vmatprep.subr.mxu0 0.0
    %1305 = vmatpush1.msra.mxu0 0.0
    %1306 = vmatprep.subr.mxu0 0.0
    %1307 = vmatpush1.msra.mxu0 0.0
    %1308 = vmatprep.subr.mxu0 0.0
    %1309 = vmatpush1.msra.mxu0 0.0
    %1310 = vmatprep.subr.mxu0 0.0
    %1311 = vmatpush1.msra.mxu0 0.0
    %1312 = vmatprep.subr.mxu0 0.0
    %1313 = vmatpush1.msra.mxu0 0.0
    %1314 = vmatprep.subr.mxu0 0.0
    %1315 = vmatpush1.msra.mxu0 0.0
    %1316 = vmatprep.subr.mxu0 0.0
    %1317 = vmatpush1.msra.mxu0 0.0
    %1318 = vmatprep.subr.mxu0 0.0
    %1319 = vmatpush1.msra.mxu0 0.0
    %1320 = vmatprep.subr.mxu0 0.0
    %1321 = vmatpush1.msra.mxu0 0.0
    %1322 = vmatprep.subr.mxu0 0.0
    %1323 = vmatpush1.msra.mxu0 0.0
    %1324 = vmatprep.subr.mxu0 0.0
    %1325 = vmatpush1.msra.mxu0 0.0
    %1326 = vmatprep.subr.mxu0 0.0
    %1327 = vmatpush1.msra.mxu0 0.0
    %1328 = vmatprep.subr.mxu0 0.0
    %1329 = vmatpush1.msra.mxu0 0.0
    %1330 = vmatprep.subr.mxu0 0.0
    %1331 = vmatpush1.msra.mxu0 0.0
    %1332 = vmatprep.subr.mxu0 0.0
    %1333 = vmatpush1.msra.mxu0 0.0
    %1334 = vmatprep.mubr.f32.mxu0 0.0
    %1335 = vmatmul.mubr.f32.gmra.mrb[0].mxu0 %v1253
    %v1336 = vpop.f32.mrb[0].mxu0
    %v1337 = vadd.f32 1e-08, %v1336
    %v1338 = vpop.f32.mrb[0].mxu0
    %1339 = vdwg.mxu0
    %v1340 = vrsqrt.pop %v1337
    %v1343 = vunpack.c.l.s4 1966171168
    %v1344 = vunpack.c.0.s8 %v1343
    %v1345 = vlaneseq
    %v1346 = vshrl.u32 %v1345, 7
    %v1347 = vsub.s32 %v1344, %v1346
    %v1348 = vrot.slane %v1340, %v1347
    %v1349 = vcombine.high %v1348, %v1348
    %v1351 = vunpack.c.l.s4 1966171168
    %v1352 = vunpack.c.0.s8 %v1351
    %v1353 = vlaneseq
    %v1354 = vshrl.u32 %v1353, 7
    %v1355 = vsub.s32 %v1352, %v1354
    %v1356 = vrot.slane %v1348, %v1355
    %v1358 = vunpack.c.l.s4 1966171168
    %v1359 = vunpack.c.0.s8 %v1358
    %v1360 = vlaneseq
    %v1361 = vshrl.u32 %v1360, 7
    %v1362 = vsub.s32 %v1359, %v1361
    %v1363 = vrot.slane %v1349, %v1362
    %v1364 = vlaneseq
    %v1365 = vshrl.u32 %v1364, 7
    %v1366 = vsub.s32 0, %v1365
    %v1367 = vrot.slane %v1356, %v1366
    %v1368 = vlaneseq
    %v1369 = vshrl.u32 %v1368, 7
    %v1370 = vsub.s32 0, %v1369
    %v1371 = vrot.slane %v1363, %v1370
    %v1374 = vmul.f32 %v1239, %v1367
    %v1375 = vmul.f32 %v1242, %v1367
    %v1376 = vmul.f32 %v1247, %v1371
    %v1377 = vmul.f32 %v1250, %v1371
    %v1378 = vld [vmem:[%s7] sm:$0xff]
    %v1379 = vld [vmem:[%s7 + $0x8] sm:$0xff]
    %v1380 = vld [vmem:[%s7 + $0x10] sm:$0xff]
    %v1381 = vld [vmem:[%s7 + $0x18] sm:$0xff]
    %1383 = vset.pattern.permute.xlu0 0
    %1384 = vperm.xlu0 %1383, %v1378
    %v1385 = vpop.permute.xlu0 %1384
    %1388 = vset.pattern.permute.xlu0 0
    %1389 = vperm.xlu0 %1388, %v1379
    %v1390 = vpop.permute.xlu0 %1389
    %1393 = vset.pattern.permute.xlu0 0
    %1394 = vperm.xlu0 %1393, %v1380
    %v1395 = vpop.permute.xlu0 %1394
    %1398 = vset.pattern.permute.xlu0 0
    %1399 = vperm.xlu0 %1398, %v1381
    %v1400 = vpop.permute.xlu0 %1399
    %v1402 = vadd.f32 %v1374, %v1385
    %v1403 = vadd.f32 %v1375, %v1390
    %v1404 = vadd.f32 %v1376, %v1395
    %v1405 = vadd.f32 %v1377, %v1400
    %v1406 = vld [vmem:[%s6] sm:$0x1]
    %v1408 = vlaneseq
    %v1409 = vshrl.u32 %v1408, 7
    %v1410 = vsub.s32 0, %v1409
    %v1411 = vrot.slane %v1406, %v1410
    %v1413 = vadd.f32 %v1402, %v1411
    %v1414 = vadd.f32 %v1403, %v1411
    %v1415 = vadd.f32 %v1404, %v1411
    %v1416 = vadd.f32 %v1405, %v1411
    %vm1417 = vcmp.ge.f32.partialorder %v1413, 0.0
    %vm1418 = vcmp.ge.f32.partialorder %v1414, 0.0
    %vm1419 = vcmp.ge.f32.partialorder %v1415, 0.0
    %vm1420 = vcmp.ge.f32.partialorder %v1416, 0.0
    %v1421 = vmul.f32 %v1413, 0.2
    %v1422 = vmul.f32 %v1414, 0.2
    %v1423 = vmul.f32 %v1415, 0.2
    %v1424 = vmul.f32 %v1416, 0.2
    %v1425 = vsel %vm1417, %v1413, %v1421
    %v1426 = vsel %vm1418, %v1414, %v1422
    %v1427 = vsel %vm1419, %v1415, %v1423
    %v1428 = vsel %vm1420, %v1416, %v1424
    %v1429 = vmul.f32 %v1425, 1.4142135
    %v1430 = vmul.f32 %v1426, 1.4142135
    %v1431 = vmul.f32 %v1427, 1.4142135
    %v1432 = vmul.f32 %v1428, 1.4142135
    %v1433 = vld [vmem:[#allocation10] sm:$0xff]
    %v1434 = vld [vmem:[#allocation10 + $0x8] sm:$0xff]
    %v1435 = vld [vmem:[#allocation10 + $0x10] sm:$0xff]
    %v1436 = vld [vmem:[#allocation10 + $0x18] sm:$0xff]
    %v1437 = vld [vmem:[#allocation10 + $0x20] sm:$0xff]
    %v1438 = vld [vmem:[#allocation10 + $0x28] sm:$0xff]
    %v1439 = vld [vmem:[#allocation10 + $0x30] sm:$0xff]
    %v1440 = vld [vmem:[#allocation10 + $0x38] sm:$0xff]
    %v1441 = vld [vmem:[#allocation10 + $0x40] sm:$0xff]
    %v1442 = vld [vmem:[#allocation10 + $0x48] sm:$0xff]
    %v1443 = vld [vmem:[#allocation10 + $0x50] sm:$0xff]
    %v1444 = vld [vmem:[#allocation10 + $0x58] sm:$0xff]
    %v1445 = vld [vmem:[#allocation10 + $0x60] sm:$0xff]
    %v1446 = vld [vmem:[#allocation10 + $0x68] sm:$0xff]
    %v1447 = vld [vmem:[#allocation10 + $0x70] sm:$0xff]
    %v1448 = vld [vmem:[#allocation10 + $0x78] sm:$0xff]
    %1449 = vmatprep.subr.mxu0 0.0
    %1450 = vmatpush1.msra.mxu0 %v1433
    %1451 = vmatprep.subr.mxu0 0.0
    %1452 = vmatpush1.msra.mxu0 %v1434
    %1453 = vmatprep.subr.mxu0 0.0
    %1454 = vmatpush1.msra.mxu0 %v1435
    %1455 = vmatprep.subr.mxu0 0.0
    %1456 = vmatpush1.msra.mxu0 %v1436
    %1457 = vmatprep.subr.mxu0 0.0
    %1458 = vmatpush1.msra.mxu0 %v1437
    %1459 = vmatprep.subr.mxu0 0.0
    %1460 = vmatpush1.msra.mxu0 %v1438
    %1461 = vmatprep.subr.mxu0 0.0
    %1462 = vmatpush1.msra.mxu0 %v1439
    %1463 = vmatprep.subr.mxu0 0.0
    %1464 = vmatpush1.msra.mxu0 %v1440
    %1465 = vmatprep.subr.mxu0 0.0
    %1466 = vmatpush1.msra.mxu0 %v1441
    %1467 = vmatprep.subr.mxu0 0.0
    %1468 = vmatpush1.msra.mxu0 %v1442
    %1469 = vmatprep.subr.mxu0 0.0
    %1470 = vmatpush1.msra.mxu0 %v1443
    %1471 = vmatprep.subr.mxu0 0.0
    %1472 = vmatpush1.msra.mxu0 %v1444
    %1473 = vmatprep.subr.mxu0 0.0
    %1474 = vmatpush1.msra.mxu0 %v1445
    %1475 = vmatprep.subr.mxu0 0.0
    %1476 = vmatpush1.msra.mxu0 %v1446
    %1477 = vmatprep.subr.mxu0 0.0
    %1478 = vmatpush1.msra.mxu0 %v1447
    %1479 = vmatprep.subr.mxu0 0.0
    %1480 = vmatpush1.msra.mxu0 %v1448
    %1481 = vmatprep.subr.mxu0 0.0
    %1482 = vmatpush1.msra.mxu0 0.0
    %1483 = vmatprep.subr.mxu0 0.0
    %1484 = vmatpush1.msra.mxu0 0.0
    %1485 = vmatprep.subr.mxu0 0.0
    %1486 = vmatpush1.msra.mxu0 0.0
    %1487 = vmatprep.subr.mxu0 0.0
    %1488 = vmatpush1.msra.mxu0 0.0
    %1489 = vmatprep.subr.mxu0 0.0
    %1490 = vmatpush1.msra.mxu0 0.0
    %1491 = vmatprep.subr.mxu0 0.0
    %1492 = vmatpush1.msra.mxu0 0.0
    %1493 = vmatprep.subr.mxu0 0.0
    %1494 = vmatpush1.msra.mxu0 0.0
    %1495 = vmatprep.subr.mxu0 0.0
    %1496 = vmatpush1.msra.mxu0 0.0
    %1497 = vmatprep.subr.mxu0 0.0
    %1498 = vmatpush1.msra.mxu0 0.0
    %1499 = vmatprep.subr.mxu0 0.0
    %1500 = vmatpush1.msra.mxu0 0.0
    %1501 = vmatprep.subr.mxu0 0.0
    %1502 = vmatpush1.msra.mxu0 0.0
    %1503 = vmatprep.subr.mxu0 0.0
    %1504 = vmatpush1.msra.mxu0 0.0
    %1505 = vmatprep.subr.mxu0 0.0
    %1506 = vmatpush1.msra.mxu0 0.0
    %1507 = vmatprep.subr.mxu0 0.0
    %1508 = vmatpush1.msra.mxu0 0.0
    %1509 = vmatprep.subr.mxu0 0.0
    %1510 = vmatpush1.msra.mxu0 0.0
    %1511 = vmatprep.subr.mxu0 0.0
    %1512 = vmatpush1.msra.mxu0 0.0
    %1513 = vmatprep.mubr.f32.mxu0 0.0
    %1514 = vmatmul.mubr.f32.gmra.mrb[0].mxu0 %v125
    %v1515 = vpop.f32.mrb[0].mxu0
    %v1516 = vadd.f32 0.0, %v1515
    %v1517 = vpop.f32.mrb[0].mxu0
    %1518 = vdwg.mxu0
    %v1519 = vmul.f32 %v1516, 0.088388346
    %v1520 = vld [vmem:[%s9] sm:$0x1]
    %v1522 = vlaneseq
    %v1523 = vshrl.u32 %v1522, 7
    %v1524 = vsub.s32 0, %v1523
    %v1525 = vrot.slane %v1520, %v1524
    %v1527 = vadd.f32 %v1519, %v1525
    %v1530 = vunpack.c.l.s4 1966171168
    %v1531 = vunpack.c.0.s8 %v1530
    %v1532 = vlaneseq
    %v1533 = vshrl.u32 %v1532, 7
    %v1534 = vsub.s32 %v1531, %v1533
    %v1535 = vrot.slane %v1527, %v1534
    %v1536 = vcombine.high %v1535, %v1535
    %v1538 = vunpack.c.l.s4 1966171168
    %v1539 = vunpack.c.0.s8 %v1538
    %v1540 = vlaneseq
    %v1541 = vshrl.u32 %v1540, 7
    %v1542 = vsub.s32 %v1539, %v1541
    %v1543 = vrot.slane %v1535, %v1542
    %v1545 = vunpack.c.l.s4 1966171168
    %v1546 = vunpack.c.0.s8 %v1545
    %v1547 = vlaneseq
    %v1548 = vshrl.u32 %v1547, 7
    %v1549 = vsub.s32 %v1546, %v1548
    %v1550 = vrot.slane %v1536, %v1549
    %v1551 = vlaneseq
    %v1552 = vshrl.u32 %v1551, 7
    %v1553 = vsub.s32 0, %v1552
    %v1554 = vrot.slane %v1543, %v1553
    %v1555 = vlaneseq
    %v1556 = vshrl.u32 %v1555, 7
    %v1557 = vsub.s32 0, %v1556
    %v1558 = vrot.slane %v1550, %v1557
    %v1561 = vmul.f32 %v1429, %v1554
    %v1562 = vmul.f32 %v1430, %v1554
    %v1563 = vmul.f32 %v1431, %v1558
    %v1564 = vmul.f32 %v1432, %v1558
    %v1565 = vld [vmem:[#allocation11] sm:$0xff]
    %v1566 = vld [vmem:[#allocation11 + $0x8] sm:$0xff]
    %v1567 = vld [vmem:[#allocation11 + $0x10] sm:$0xff]
    %v1568 = vld [vmem:[#allocation11 + $0x18] sm:$0xff]
    %v1569 = vld [vmem:[#allocation11 + $0x20] sm:$0xff]
    %v1570 = vld [vmem:[#allocation11 + $0x28] sm:$0xff]
    %v1571 = vld [vmem:[#allocation11 + $0x30] sm:$0xff]
    %v1572 = vld [vmem:[#allocation11 + $0x38] sm:$0xff]
    %v1573 = vld [vmem:[#allocation11 + $0x40] sm:$0xff]
    %v1574 = vld [vmem:[#allocation11 + $0x48] sm:$0xff]
    %v1575 = vld [vmem:[#allocation11 + $0x50] sm:$0xff]
    %v1576 = vld [vmem:[#allocation11 + $0x58] sm:$0xff]
    %v1577 = vld [vmem:[#allocation11 + $0x60] sm:$0xff]
    %v1578 = vld [vmem:[#allocation11 + $0x68] sm:$0xff]
    %v1579 = vld [vmem:[#allocation11 + $0x70] sm:$0xff]
    %v1580 = vld [vmem:[#allocation11 + $0x78] sm:$0xff]
    %v1581 = vld [vmem:[%s11] sm:$0x1]
    %v1583 = vlaneseq
    %v1584 = vshrl.u32 %v1583, 7
    %v1585 = vsub.s32 0, %v1584
    %v1586 = vrot.slane %v1581, %v1585
    %1588 = vmatprep.subr.mxu0 0.0
    %1589 = vmatpush1.msra.mxu0 %v1565
    %1590 = vmatprep.subr.mxu0 0.0
    %1591 = vmatpush1.msra.mxu0 %v1566
    %1592 = vmatprep.subr.mxu0 0.0
    %1593 = vmatpush1.msra.mxu0 %v1567
    %1594 = vmatprep.subr.mxu0 0.0
    %1595 = vmatpush1.msra.mxu0 %v1568
    %1596 = vmatprep.subr.mxu0 0.0
    %1597 = vmatpush1.msra.mxu0 %v1569
    %1598 = vmatprep.subr.mxu0 0.0
    %1599 = vmatpush1.msra.mxu0 %v1570
    %1600 = vmatprep.subr.mxu0 0.0
    %1601 = vmatpush1.msra.mxu0 %v1571
    %1602 = vmatprep.subr.mxu0 0.0
    %1603 = vmatpush1.msra.mxu0 %v1572
    %1604 = vmatprep.subr.mxu0 0.0
    %1605 = vmatpush1.msra.mxu0 %v1573
    %1606 = vmatprep.subr.mxu0 0.0
    %1607 = vmatpush1.msra.mxu0 %v1574
    %1608 = vmatprep.subr.mxu0 0.0
    %1609 = vmatpush1.msra.mxu0 %v1575
    %1610 = vmatprep.subr.mxu0 0.0
    %1611 = vmatpush1.msra.mxu0 %v1576
    %1612 = vmatprep.subr.mxu0 0.0
    %1613 = vmatpush1.msra.mxu0 %v1577
    %1614 = vmatprep.subr.mxu0 0.0
    %1615 = vmatpush1.msra.mxu0 %v1578
    %1616 = vmatprep.subr.mxu0 0.0
    %1617 = vmatpush1.msra.mxu0 %v1579
    %1618 = vmatprep.subr.mxu0 0.0
    %1619 = vmatpush1.msra.mxu0 %v1580
    %1620 = vmatprep.subr.mxu0 0.0
    %1621 = vmatpush1.msra.mxu0 0.0
    %1622 = vmatprep.subr.mxu0 0.0
    %1623 = vmatpush1.msra.mxu0 0.0
    %1624 = vmatprep.subr.mxu0 0.0
    %1625 = vmatpush1.msra.mxu0 0.0
    %1626 = vmatprep.subr.mxu0 0.0
    %1627 = vmatpush1.msra.mxu0 0.0
    %1628 = vmatprep.subr.mxu0 0.0
    %1629 = vmatpush1.msra.mxu0 0.0
    %1630 = vmatprep.subr.mxu0 0.0
    %1631 = vmatpush1.msra.mxu0 0.0
    %1632 = vmatprep.subr.mxu0 0.0
    %1633 = vmatpush1.msra.mxu0 0.0
    %1634 = vmatprep.subr.mxu0 0.0
    %1635 = vmatpush1.msra.mxu0 0.0
    %1636 = vmatprep.subr.mxu0 0.0
    %1637 = vmatpush1.msra.mxu0 0.0
    %1638 = vmatprep.subr.mxu0 0.0
    %1639 = vmatpush1.msra.mxu0 0.0
    %1640 = vmatprep.subr.mxu0 0.0
    %1641 = vmatpush1.msra.mxu0 0.0
    %1642 = vmatprep.subr.mxu0 0.0
    %1643 = vmatpush1.msra.mxu0 0.0
    %1644 = vmatprep.subr.mxu0 0.0
    %1645 = vmatpush1.msra.mxu0 0.0
    %1646 = vmatprep.subr.mxu0 0.0
    %1647 = vmatpush1.msra.mxu0 0.0
    %1648 = vmatprep.subr.mxu0 0.0
    %1649 = vmatpush1.msra.mxu0 0.0
    %1650 = vmatprep.subr.mxu0 0.0
    %1651 = vmatpush1.msra.mxu0 0.0
    %1652 = vmatprep.mubr.f32.mxu0 0.0
    %1653 = vmatmul.mubr.f32.gmra.mrb[0].mxu0 %v1561
    %v1654 = vpop.f32.mrb[0].mxu0
    %v1655 = vadd.f32 %v1586, %v1654
    %v1656 = vpop.f32.mrb[0].mxu0
    %1657 = vmatprep.mubr.f32.mxu0 0.0
    %1658 = vmatmul.mubr.f32.gmra.mrb[0].mxu0 %v1562
    %v1659 = vpop.f32.mrb[0].mxu0
    %v1660 = vadd.f32 %v1586, %v1659
    %v1661 = vpop.f32.mrb[0].mxu0
    %1662 = vmatprep.mubr.f32.mxu0 0.0
    %1663 = vmatmul.mubr.f32.gmra.mrb[0].mxu0 %v1563
    %v1664 = vpop.f32.mrb[0].mxu0
    %v1665 = vadd.f32 %v1586, %v1664
    %v1666 = vpop.f32.mrb[0].mxu0
    %1667 = vmatprep.mubr.f32.mxu0 0.0
    %1668 = vmatmul.mubr.f32.gmra.mrb[0].mxu0 %v1564
    %v1669 = vpop.f32.mrb[0].mxu0
    %v1670 = vadd.f32 %v1586, %v1669
    %v1671 = vpop.f32.mrb[0].mxu0
    %1672 = vdwg.mxu0
    %1673 = vst [vmem:[#allocation13] sm:$0xff] %v1655
    %1674 = vst [vmem:[#allocation13 + $0x8] sm:$0xff] %v1660
    %1675 = vst [vmem:[#allocation13 + $0x10] sm:$0xff] %v1665
    %1676 = vst [vmem:[#allocation13 + $0x18] sm:$0xff] %v1670
    // Predicated region
    $region74: #{tpu_custom_call.1} parent=1 // pred_check
      _
    $region75: #{tpu_custom_call.1} parent=1 // pred_check_branch
      %1678 = sbr.rel (0) target = $region77
    $region76: #{tpu_custom_call.1} parent=1 // pred_region
      %s1680 = ssub.s32 512, 512
      %1681 = vsyncadd [#allocation4], %s1680
      %s1682 = sshll.u32 [#allocation13], 4
      %s1683 = int_to_ptr.vmem [resolvable:$true] %s1682
      %1688 = dma.vmem_to_hbm [thread:$0]  %s1683, 512, %s12, [#allocation4], 128, 128, 8
    $region77: #{tpu_custom_call.1} parent=1 // pred_fallthru
      _
    // Predicated region
    $region78: #{tpu_custom_call.1} parent=1 // pred_check
      _
    $region79: #{tpu_custom_call.1} parent=1 // pred_check_branch
      %1690 = sbr.rel (0) target = $region81
    $region80: #{tpu_custom_call.1} parent=1 // pred_region
      %1691 = dma.done [#allocation4], 512
    $region81: #{tpu_custom_call.1} parent=1 // pred_fallthru
      _
    %1692 = vsyncpa [#allocation3], 1
    %1693 = vsyncpa [#allocation6], 1
    %1694 = vsyncpa [#allocation9], 1
    %1695 = vsyncpa [#allocation12], 1
    %1696 = vsyncpa [#allocation4], 1

</llo_original>
